<compile_context>
chip_gen: v6e
topology: v6e:2x2x1
jax: 0.10.0
libtpu: 0.0.40
codegen_flags: <defaults>
</compile_context>

<pallas_src>
import jax
import jax.numpy as jnp
from jax.experimental import pallas as pl
from jax.experimental.pallas import tpu as pltpu


# --------------------------------------------------------------------------
# Fused ResidualLayer kernel
# --------------------------------------------------------------------------
def _residual_layer_kernel(x_ref, w3_ref, w1_ref, o_ref, xpad_ref):
    # x_ref   : (N, H, W, C)      activations, NHWC (lane = C, sublane = W)
    # w3_ref  : (3, 3, C, Chid)   3x3 conv weights, HWIO
    # w1_ref  : (Chid, C)         1x1 conv weights, pre-transposed for matmul
    # o_ref   : (N, H, W, C)
    # xpad_ref: (N, H+2, W+2, C)  VMEM scratch: zero-padded ReLU(x)
    n, h, w, c = x_ref.shape
    chid = w3_ref.shape[-1]
    m = n * h * w

    x = x_ref[...]                                     # residual-path activations

    # In-kernel "same" padding of ReLU(x): zero the halo slab (one aligned
    # bulk store), then write the interior once.
    xpad_ref[...] = jnp.zeros_like(xpad_ref)
    xpad_ref[:, 1:h + 1, 1:w + 1, :] = jnp.maximum(x, 0.0)

    # 3x3 conv (bias-free): 9 per-tap matmuls over the batch-folded (M, C)
    # slab, accumulated in f32.  First tap initializes acc directly.
    acc = None
    for kh in range(3):
        for kw in range(3):
            slab = xpad_ref[:, kh:kh + h, kw:kw + w, :].reshape(m, c)
            tap = jnp.dot(slab, w3_ref[kh, kw],
                          preferred_element_type=jnp.float32)
            acc = tap if acc is None else acc + tap

    # ReLU -> 1x1 conv (bias-free) -> residual add, all fused on the slab.
    hidden = jnp.maximum(acc, 0.0)                     # (M, Chid)
    y = x.reshape(m, c) + jnp.dot(hidden, w1_ref[...],
                                  preferred_element_type=jnp.float32)

    o_ref[...] = y.reshape(n, h, w, c)                 # single unmasked store


def residual_layer_nhwc(x_nhwc, w3_hwio, w1_mat):
    n, h, w, c = x_nhwc.shape
    chid = w3_hwio.shape[-1]
    return pl.pallas_call(
        _residual_layer_kernel,
        out_shape=jax.ShapeDtypeStruct((n, h, w, c), jnp.float32),
        grid=(1,),
        in_specs=[
            pl.BlockSpec((n, h, w, c), lambda i: (0, 0, 0, 0)),
            pl.BlockSpec((3, 3, c, chid), lambda i: (0, 0, 0, 0)),
            pl.BlockSpec((chid, c), lambda i: (0, 0)),
        ],
        out_specs=pl.BlockSpec((n, h, w, c), lambda i: (0, 0, 0, 0)),
        scratch_shapes=[pltpu.VMEM((n, h + 2, w + 2, c), jnp.float32)],
        compiler_params=pltpu.CompilerParams(
            dimension_semantics=("arbitrary",)),
    )(x_nhwc, w3_hwio, w1_mat)


# --------------------------------------------------------------------------
# Parameter prep (weight-layout transforms done ONCE, not per forward call)
# --------------------------------------------------------------------------
def prepare_params(w3_oihw, w1_oihw):
    # PyTorch Conv2d weights: (out, in, kh, kw).
    return {
        "w3": jnp.transpose(w3_oihw, (2, 3, 1, 0)).astype(jnp.float32),        # (3,3,Cin,Chid)
        "w1": jnp.transpose(w1_oihw[:, :, 0, 0], (1, 0)).astype(jnp.float32),  # (Chid, C)
    }


def residual_layer_forward(x_nchw, params):
    """PyTorch-facing NCHW interface: y = x + conv1x1(relu(conv3x3(relu(x))))."""
    x_nhwc = jnp.transpose(x_nchw.astype(jnp.float32), (0, 2, 3, 1))
    y = residual_layer_nhwc(x_nhwc, params["w3"], params["w1"])
    return jnp.transpose(y, (0, 3, 1, 2))


# --------------------------------------------------------------------------
# Pure-JAX reference (matches PyTorch ResidualLayer.forward)
# --------------------------------------------------------------------------
def reference(x_nchw, w3_oihw, w1_oihw):
    dn = ("NCHW", "OIHW", "NCHW")
    hdn = jax.nn.relu(x_nchw)
    hdn = jax.lax.conv_general_dilated(
        hdn, w3_oihw, (1, 1), ((1, 1), (1, 1)), dimension_numbers=dn,
        precision=jax.lax.Precision.HIGHEST)
    hdn = jax.nn.relu(hdn)
    hdn = jax.lax.conv_general_dilated(
        hdn, w1_oihw, (1, 1), "VALID", dimension_numbers=dn,
        precision=jax.lax.Precision.HIGHEST)
    return x_nchw + hdn


if __name__ == "__main__":
    key = jax.random.PRNGKey(0)
    k_x, k_w3, k_w1 = jax.random.split(key, 3)

    # ResidualLayer(in_dim=128, h_dim=128, res_h_dim=64) on a small 8x8 map.
    N, C, H, W = 2, 128, 8, 8
    CHID = 64

    x = jax.random.normal(k_x, (N, C, H, W), jnp.float32)
    w3_pt = jax.random.normal(k_w3, (CHID, C, 3, 3), jnp.float32) / jnp.sqrt(9.0 * C)
    w1_pt = jax.random.normal(k_w1, (C, CHID, 1, 1), jnp.float32) / jnp.sqrt(1.0 * CHID)

    params = prepare_params(w3_pt, w1_pt)
    fwd = jax.jit(lambda inp: residual_layer_forward(inp, params))

    out = jax.block_until_ready(fwd(x))
    assert out.shape == (N, C, H, W), out.shape
    assert out.dtype == jnp.float32

    ref = jax.block_until_ready(reference(x, w3_pt, w1_pt))
    max_err = float(jnp.max(jnp.abs(out - ref)))
    assert max_err < 5e-2, f"max abs error {max_err}"

    print("KERNEL_OK")
</pallas_src>

<mosaic_0001>
module attributes {stable_mosaic.version = 11 : i64} {
  func.func @_residual_layer_kernel(%arg0: i32, %arg1: memref<2x8x8x128xf32, #tpu.memory_space<vmem>>, %arg2: memref<3x3x128x64xf32, #tpu.memory_space<vmem>>, %arg3: memref<64x128xf32, #tpu.memory_space<vmem>>, %arg4: memref<2x8x8x128xf32, #tpu.memory_space<vmem>>, %arg5: memref<2x10x10x128xf32, #tpu.memory_space<vmem>>) attributes {dimension_semantics = [#tpu.dimension_semantics<arbitrary>], iteration_bounds = array<i64: 1>, scalar_prefetch = 0 : i64, scratch_operands = 1 : i64, tpu.core_type = #tpu.core_type<tc>, window_params = [{pipeline_mode = #tpu.pipeline_mode<synchronous>, transform_indices = @transform_0, window_bounds = array<i64: 2, 8, 8, 128>}, {pipeline_mode = #tpu.pipeline_mode<synchronous>, transform_indices = @transform_1, window_bounds = array<i64: 3, 3, 128, 64>}, {pipeline_mode = #tpu.pipeline_mode<synchronous>, transform_indices = @transform_2, window_bounds = array<i64: 64, 128>}, {pipeline_mode = #tpu.pipeline_mode<synchronous>, transform_indices = @transform_3, window_bounds = array<i64: 2, 8, 8, 128>}]} {
    %c0 = arith.constant 0 : index
    %c0_0 = arith.constant 0 : index
    %c0_1 = arith.constant 0 : index
    %c0_2 = arith.constant 0 : index
    %0 = vector.load %arg1[%c0, %c0_0, %c0_1, %c0_2] : memref<2x8x8x128xf32, #tpu.memory_space<vmem>>, vector<2x8x8x128xf32>
    %cst = arith.constant 0.000000e+00 : f32
    %1 = vector.broadcast %cst : f32 to vector<2x10x10x128xf32>
    %c0_3 = arith.constant 0 : index
    %c0_4 = arith.constant 0 : index
    %c0_5 = arith.constant 0 : index
    %c0_6 = arith.constant 0 : index
    %2 = vector.load %arg5[%c0_3, %c0_4, %c0_5, %c0_6] : memref<2x10x10x128xf32, #tpu.memory_space<vmem>>, vector<2x10x10x128xf32>
    tpu.vector_store %arg5[%c0_3, %c0_4, %c0_5, %c0_6], %1 {strides = array<i32>} : memref<2x10x10x128xf32, #tpu.memory_space<vmem>>, vector<2x10x10x128xf32>,
    %cst_7 = arith.constant 0.000000e+00 : f32
    %3 = vector.broadcast %cst_7 : f32 to vector<2x8x8x128xf32>
    %4 = arith.maximumf %0, %3 : vector<2x8x8x128xf32>
    %c0_8 = arith.constant 0 : index
    %c1 = arith.constant 1 : index
    %c1_9 = arith.constant 1 : index
    %c0_10 = arith.constant 0 : index
    %5 = vector.load %arg5[%c0_8, %c1, %c1_9, %c0_10] : memref<2x10x10x128xf32, #tpu.memory_space<vmem>>, vector<2x8x8x128xf32>
    tpu.vector_store %arg5[%c0_8, %c1, %c1_9, %c0_10], %4 {strides = array<i32>} : memref<2x10x10x128xf32, #tpu.memory_space<vmem>>, vector<2x8x8x128xf32>,
    %c0_11 = arith.constant 0 : index
    %c0_12 = arith.constant 0 : index
    %c0_13 = arith.constant 0 : index
    %c0_14 = arith.constant 0 : index
    %6 = vector.load %arg5[%c0_11, %c0_12, %c0_13, %c0_14] : memref<2x10x10x128xf32, #tpu.memory_space<vmem>>, vector<2x8x8x128xf32>
    %7 = vector.shape_cast %6 : vector<2x8x8x128xf32> to vector<128x128xf32>
    %c0_15 = arith.constant 0 : index
    %c0_16 = arith.constant 0 : index
    %c0_17 = arith.constant 0 : index
    %c0_18 = arith.constant 0 : index
    %8 = vector.load %arg2[%c0_15, %c0_16, %c0_17, %c0_18] : memref<3x3x128x64xf32, #tpu.memory_space<vmem>>, vector<1x1x128x64xf32>
    %9 = vector.shape_cast %8 : vector<1x1x128x64xf32> to vector<128x64xf32>
    %cst_19 = arith.constant dense<0.000000e+00> : vector<128x64xf32>
    %10 = tpu.matmul %7, %9, %cst_19 {dimension_numbers = #tpu.dot_dimension_numbers<[1], [0], [0], [1], [0, 0, 1, 1], [], []>} : vector<128x128xf32>, vector<128x64xf32>, vector<128x64xf32> -> vector<128x64xf32>
    %c0_20 = arith.constant 0 : index
    %c0_21 = arith.constant 0 : index
    %c1_22 = arith.constant 1 : index
    %c0_23 = arith.constant 0 : index
    %11 = vector.load %arg5[%c0_20, %c0_21, %c1_22, %c0_23] : memref<2x10x10x128xf32, #tpu.memory_space<vmem>>, vector<2x8x8x128xf32>
    %12 = vector.shape_cast %11 : vector<2x8x8x128xf32> to vector<128x128xf32>
    %c0_24 = arith.constant 0 : index
    %c1_25 = arith.constant 1 : index
    %c0_26 = arith.constant 0 : index
    %c0_27 = arith.constant 0 : index
    %13 = vector.load %arg2[%c0_24, %c1_25, %c0_26, %c0_27] : memref<3x3x128x64xf32, #tpu.memory_space<vmem>>, vector<1x1x128x64xf32>
    %14 = vector.shape_cast %13 : vector<1x1x128x64xf32> to vector<128x64xf32>
    %cst_28 = arith.constant dense<0.000000e+00> : vector<128x64xf32>
    %15 = tpu.matmul %12, %14, %cst_28 {dimension_numbers = #tpu.dot_dimension_numbers<[1], [0], [0], [1], [0, 0, 1, 1], [], []>} : vector<128x128xf32>, vector<128x64xf32>, vector<128x64xf32> -> vector<128x64xf32>
    %16 = arith.addf %10, %15 : vector<128x64xf32>
    %c0_29 = arith.constant 0 : index
    %c0_30 = arith.constant 0 : index
    %c2 = arith.constant 2 : index
    %c0_31 = arith.constant 0 : index
    %17 = vector.load %arg5[%c0_29, %c0_30, %c2, %c0_31] : memref<2x10x10x128xf32, #tpu.memory_space<vmem>>, vector<2x8x8x128xf32>
    %18 = vector.shape_cast %17 : vector<2x8x8x128xf32> to vector<128x128xf32>
    %c0_32 = arith.constant 0 : index
    %c2_33 = arith.constant 2 : index
    %c0_34 = arith.constant 0 : index
    %c0_35 = arith.constant 0 : index
    %19 = vector.load %arg2[%c0_32, %c2_33, %c0_34, %c0_35] : memref<3x3x128x64xf32, #tpu.memory_space<vmem>>, vector<1x1x128x64xf32>
    %20 = vector.shape_cast %19 : vector<1x1x128x64xf32> to vector<128x64xf32>
    %cst_36 = arith.constant dense<0.000000e+00> : vector<128x64xf32>
    %21 = tpu.matmul %18, %20, %cst_36 {dimension_numbers = #tpu.dot_dimension_numbers<[1], [0], [0], [1], [0, 0, 1, 1], [], []>} : vector<128x128xf32>, vector<128x64xf32>, vector<128x64xf32> -> vector<128x64xf32>
    %22 = arith.addf %16, %21 : vector<128x64xf32>
    %c0_37 = arith.constant 0 : index
    %c1_38 = arith.constant 1 : index
    %c0_39 = arith.constant 0 : index
    %c0_40 = arith.constant 0 : index
    %23 = vector.load %arg5[%c0_37, %c1_38, %c0_39, %c0_40] : memref<2x10x10x128xf32, #tpu.memory_space<vmem>>, vector<2x8x8x128xf32>
    %24 = vector.shape_cast %23 : vector<2x8x8x128xf32> to vector<128x128xf32>
    %c1_41 = arith.constant 1 : index
    %c0_42 = arith.constant 0 : index
    %c0_43 = arith.constant 0 : index
    %c0_44 = arith.constant 0 : index
    %25 = vector.load %arg2[%c1_41, %c0_42, %c0_43, %c0_44] : memref<3x3x128x64xf32, #tpu.memory_space<vmem>>, vector<1x1x128x64xf32>
    %26 = vector.shape_cast %25 : vector<1x1x128x64xf32> to vector<128x64xf32>
    %cst_45 = arith.constant dense<0.000000e+00> : vector<128x64xf32>
    %27 = tpu.matmul %24, %26, %cst_45 {dimension_numbers = #tpu.dot_dimension_numbers<[1], [0], [0], [1], [0, 0, 1, 1], [], []>} : vector<128x128xf32>, vector<128x64xf32>, vector<128x64xf32> -> vector<128x64xf32>
    %28 = arith.addf %22, %27 : vector<128x64xf32>
    %c0_46 = arith.constant 0 : index
    %c1_47 = arith.constant 1 : index
    %c1_48 = arith.constant 1 : index
    %c0_49 = arith.constant 0 : index
    %29 = vector.load %arg5[%c0_46, %c1_47, %c1_48, %c0_49] : memref<2x10x10x128xf32, #tpu.memory_space<vmem>>, vector<2x8x8x128xf32>
    %30 = vector.shape_cast %29 : vector<2x8x8x128xf32> to vector<128x128xf32>
    %c1_50 = arith.constant 1 : index
    %c1_51 = arith.constant 1 : index
    %c0_52 = arith.constant 0 : index
    %c0_53 = arith.constant 0 : index
    %31 = vector.load %arg2[%c1_50, %c1_51, %c0_52, %c0_53] : memref<3x3x128x64xf32, #tpu.memory_space<vmem>>, vector<1x1x128x64xf32>
    %32 = vector.shape_cast %31 : vector<1x1x128x64xf32> to vector<128x64xf32>
    %cst_54 = arith.constant dense<0.000000e+00> : vector<128x64xf32>
    %33 = tpu.matmul %30, %32, %cst_54 {dimension_numbers = #tpu.dot_dimension_numbers<[1], [0], [0], [1], [0, 0, 1, 1], [], []>} : vector<128x128xf32>, vector<128x64xf32>, vector<128x64xf32> -> vector<128x64xf32>
    %34 = arith.addf %28, %33 : vector<128x64xf32>
    %c0_55 = arith.constant 0 : index
    %c1_56 = arith.constant 1 : index
    %c2_57 = arith.constant 2 : index
    %c0_58 = arith.constant 0 : index
    %35 = vector.load %arg5[%c0_55, %c1_56, %c2_57, %c0_58] : memref<2x10x10x128xf32, #tpu.memory_space<vmem>>, vector<2x8x8x128xf32>
    %36 = vector.shape_cast %35 : vector<2x8x8x128xf32> to vector<128x128xf32>
    %c1_59 = arith.constant 1 : index
    %c2_60 = arith.constant 2 : index
    %c0_61 = arith.constant 0 : index
    %c0_62 = arith.constant 0 : index
    %37 = vector.load %arg2[%c1_59, %c2_60, %c0_61, %c0_62] : memref<3x3x128x64xf32, #tpu.memory_space<vmem>>, vector<1x1x128x64xf32>
    %38 = vector.shape_cast %37 : vector<1x1x128x64xf32> to vector<128x64xf32>
    %cst_63 = arith.constant dense<0.000000e+00> : vector<128x64xf32>
    %39 = tpu.matmul %36, %38, %cst_63 {dimension_numbers = #tpu.dot_dimension_numbers<[1], [0], [0], [1], [0, 0, 1, 1], [], []>} : vector<128x128xf32>, vector<128x64xf32>, vector<128x64xf32> -> vector<128x64xf32>
    %40 = arith.addf %34, %39 : vector<128x64xf32>
    %c0_64 = arith.constant 0 : index
    %c2_65 = arith.constant 2 : index
    %c0_66 = arith.constant 0 : index
    %c0_67 = arith.constant 0 : index
    %41 = vector.load %arg5[%c0_64, %c2_65, %c0_66, %c0_67] : memref<2x10x10x128xf32, #tpu.memory_space<vmem>>, vector<2x8x8x128xf32>
    %42 = vector.shape_cast %41 : vector<2x8x8x128xf32> to vector<128x128xf32>
    %c2_68 = arith.constant 2 : index
    %c0_69 = arith.constant 0 : index
    %c0_70 = arith.constant 0 : index
    %c0_71 = arith.constant 0 : index
    %43 = vector.load %arg2[%c2_68, %c0_69, %c0_70, %c0_71] : memref<3x3x128x64xf32, #tpu.memory_space<vmem>>, vector<1x1x128x64xf32>
    %44 = vector.shape_cast %43 : vector<1x1x128x64xf32> to vector<128x64xf32>
    %cst_72 = arith.constant dense<0.000000e+00> : vector<128x64xf32>
    %45 = tpu.matmul %42, %44, %cst_72 {dimension_numbers = #tpu.dot_dimension_numbers<[1], [0], [0], [1], [0, 0, 1, 1], [], []>} : vector<128x128xf32>, vector<128x64xf32>, vector<128x64xf32> -> vector<128x64xf32>
    %46 = arith.addf %40, %45 : vector<128x64xf32>
    %c0_73 = arith.constant 0 : index
    %c2_74 = arith.constant 2 : index
    %c1_75 = arith.constant 1 : index
    %c0_76 = arith.constant 0 : index
    %47 = vector.load %arg5[%c0_73, %c2_74, %c1_75, %c0_76] : memref<2x10x10x128xf32, #tpu.memory_space<vmem>>, vector<2x8x8x128xf32>
    %48 = vector.shape_cast %47 : vector<2x8x8x128xf32> to vector<128x128xf32>
    %c2_77 = arith.constant 2 : index
    %c1_78 = arith.constant 1 : index
    %c0_79 = arith.constant 0 : index
    %c0_80 = arith.constant 0 : index
    %49 = vector.load %arg2[%c2_77, %c1_78, %c0_79, %c0_80] : memref<3x3x128x64xf32, #tpu.memory_space<vmem>>, vector<1x1x128x64xf32>
    %50 = vector.shape_cast %49 : vector<1x1x128x64xf32> to vector<128x64xf32>
    %cst_81 = arith.constant dense<0.000000e+00> : vector<128x64xf32>
    %51 = tpu.matmul %48, %50, %cst_81 {dimension_numbers = #tpu.dot_dimension_numbers<[1], [0], [0], [1], [0, 0, 1, 1], [], []>} : vector<128x128xf32>, vector<128x64xf32>, vector<128x64xf32> -> vector<128x64xf32>
    %52 = arith.addf %46, %51 : vector<128x64xf32>
    %c0_82 = arith.constant 0 : index
    %c2_83 = arith.constant 2 : index
    %c2_84 = arith.constant 2 : index
    %c0_85 = arith.constant 0 : index
    %53 = vector.load %arg5[%c0_82, %c2_83, %c2_84, %c0_85] : memref<2x10x10x128xf32, #tpu.memory_space<vmem>>, vector<2x8x8x128xf32>
    %54 = vector.shape_cast %53 : vector<2x8x8x128xf32> to vector<128x128xf32>
    %c2_86 = arith.constant 2 : index
    %c2_87 = arith.constant 2 : index
    %c0_88 = arith.constant 0 : index
    %c0_89 = arith.constant 0 : index
    %55 = vector.load %arg2[%c2_86, %c2_87, %c0_88, %c0_89] : memref<3x3x128x64xf32, #tpu.memory_space<vmem>>, vector<1x1x128x64xf32>
    %56 = vector.shape_cast %55 : vector<1x1x128x64xf32> to vector<128x64xf32>
    %cst_90 = arith.constant dense<0.000000e+00> : vector<128x64xf32>
    %57 = tpu.matmul %54, %56, %cst_90 {dimension_numbers = #tpu.dot_dimension_numbers<[1], [0], [0], [1], [0, 0, 1, 1], [], []>} : vector<128x128xf32>, vector<128x64xf32>, vector<128x64xf32> -> vector<128x64xf32>
    %58 = arith.addf %52, %57 : vector<128x64xf32>
    %cst_91 = arith.constant 0.000000e+00 : f32
    %59 = vector.broadcast %cst_91 : f32 to vector<128x64xf32>
    %60 = arith.maximumf %58, %59 : vector<128x64xf32>
    %61 = vector.shape_cast %0 : vector<2x8x8x128xf32> to vector<128x128xf32>
    %c0_92 = arith.constant 0 : index
    %c0_93 = arith.constant 0 : index
    %62 = vector.load %arg3[%c0_92, %c0_93] : memref<64x128xf32, #tpu.memory_space<vmem>>, vector<64x128xf32>
    %cst_94 = arith.constant dense<0.000000e+00> : vector<128x128xf32>
    %63 = tpu.matmul %60, %62, %cst_94 {dimension_numbers = #tpu.dot_dimension_numbers<[1], [0], [0], [1], [0, 0, 1, 1], [], []>} : vector<128x64xf32>, vector<64x128xf32>, vector<128x128xf32> -> vector<128x128xf32>
    %64 = arith.addf %61, %63 : vector<128x128xf32>
    %65 = vector.shape_cast %64 : vector<128x128xf32> to vector<2x8x8x128xf32>
    %c0_95 = arith.constant 0 : index
    %c0_96 = arith.constant 0 : index
    %c0_97 = arith.constant 0 : index
    %c0_98 = arith.constant 0 : index
    %66 = vector.load %arg4[%c0_95, %c0_96, %c0_97, %c0_98] : memref<2x8x8x128xf32, #tpu.memory_space<vmem>>, vector<2x8x8x128xf32>
    tpu.vector_store %arg4[%c0_95, %c0_96, %c0_97, %c0_98], %65 {strides = array<i32>} : memref<2x8x8x128xf32, #tpu.memory_space<vmem>>, vector<2x8x8x128xf32>,
    return
  }
  func.func @transform_0(%arg0: i32) -> (i32, i32, i32, i32) {
    %c0_i32 = arith.constant 0 : i32
    %c0_i32_0 = arith.constant 0 : i32
    %c0_i32_1 = arith.constant 0 : i32
    %c0_i32_2 = arith.constant 0 : i32
    %c0_i32_3 = arith.constant 0 : i32
    return %c0_i32, %c0_i32_0, %c0_i32_1, %c0_i32_2 : i32, i32, i32, i32
  }
  func.func @transform_1(%arg0: i32) -> (i32, i32, i32, i32) {
    %c0_i32 = arith.constant 0 : i32
    %c0_i32_0 = arith.constant 0 : i32
    %c0_i32_1 = arith.constant 0 : i32
    %c0_i32_2 = arith.constant 0 : i32
    %c0_i32_3 = arith.constant 0 : i32
    return %c0_i32, %c0_i32_0, %c0_i32_1, %c0_i32_2 : i32, i32, i32, i32
  }
  func.func @transform_2(%arg0: i32) -> (i32, i32) {
    %c0_i32 = arith.constant 0 : i32
    %c0_i32_0 = arith.constant 0 : i32
    %c0_i32_1 = arith.constant 0 : i32
    return %c0_i32, %c0_i32_0 : i32, i32
  }
  func.func @transform_3(%arg0: i32) -> (i32, i32, i32, i32) {
    %c0_i32 = arith.constant 0 : i32
    %c0_i32_0 = arith.constant 0 : i32
    %c0_i32_1 = arith.constant 0 : i32
    %c0_i32_2 = arith.constant 0 : i32
    %c0_i32_3 = arith.constant 0 : i32
    return %c0_i32, %c0_i32_0, %c0_i32_1, %c0_i32_2 : i32, i32, i32, i32
  }
}

</mosaic_0001>

<llo_original>
// kernel: _lambda_.1
$region0: #{_lambda_.1}
  #allocation0 [shape = 'u32[]', space=smem, size = 0x4, offset = 0x4, fixed_abs, tag = 'smem constant byte address 0x4 - core index']
  #allocation1 [shape = 'u32[144,128]{1,0:T(1,128)}', space=vmem, size = 0x12000, scoped, tag = 'internal scratch']
  #allocation2 [shape = 'f32[2,10,10,128]{3,2,1,0:T(8,128)}', space=vmem, size = 0x28000, scoped, tag = 'scratch operand']
  %s0 = inlined_call_operand.hbm [shape: f32[2,8,8,128], index: 0, kind: input, shape index: {}]
  %s1 = inlined_call_operand.hbm [shape: f32[3,3,128,64], index: 1, kind: input, shape index: {}]
  %s2 = inlined_call_operand.hbm [shape: f32[64,128], index: 2, kind: input, shape index: {}]
  %s3 = inlined_call_operand.hbm [shape: f32[2,8,8,128], index: 3, kind: output, shape index: {}]
  %s4 = sld [smem:[#allocation0]]
  $region34: #{_lambda_.1} parent=0
    _
  %s6 = ssub.s32 1, %s4
  %s7 = scalar_select 0, %s6, %s4
  $region1: #{_lambda_.1} parent=0
    #allocation3 [shape = 'u8[65536]{0}', space=vmem, size = 0x10000, scoped, tag = 'input window, operand 0, single buffered']
    #allocation4 [shape = 's32[1]{0}', space=sflag, size = 0x4, scoped, tag = 'scoped memory for _lambda_.1']
    #allocation5 [shape = 's32[1]{0}', space=sflag, size = 0x4, scoped, tag = 'scoped memory for _lambda_.1']
    #allocation6 [shape = 'u8[589824]{0}', space=vmem, size = 0x90000, scoped, tag = 'input window, operand 1, single buffered']
    #allocation7 [shape = 's32[1]{0}', space=sflag, size = 0x4, scoped, tag = 'scoped memory for _lambda_.1']
    #allocation8 [shape = 'u8[32768]{0}', space=vmem, size = 0x8000, scoped, tag = 'input window, operand 2, single buffered']
    #allocation9 [shape = 'u8[65536]{0}', space=vmem, size = 0x10000, scoped, tag = 'output window, operand 0, single buffered']
    %8 = vsyncpa [#allocation4], 0
    %9 = vsyncpa [#allocation7], 0
    %10 = vsyncpa [#allocation5], 0
    // Predicated region
    $region2: #{_lambda_.1} parent=1 // pred_check
      _
    $region3: #{_lambda_.1} parent=1 // pred_check_branch
      %12 = sbr.rel (0) target = $region5
    $region4: #{_lambda_.1} parent=1 // pred_region
      %s14 = ssub.s32 2048, 2048
      %15 = vsyncadd [#allocation4], %s14
      %s16 = sshll.u32 [#allocation3], 4
      %s17 = int_to_ptr.vmem [resolvable:$true] %s16
      %22 = dma.hbm_to_vmem [thread:$0]  %s0, 2048, %s17, [#allocation4], 128, 128, 8
    $region5: #{_lambda_.1} parent=1 // pred_fallthru
      _
    // Predicated region
    $region6: #{_lambda_.1} parent=1 // pred_check
      _
    $region7: #{_lambda_.1} parent=1 // pred_check_branch
      %24 = sbr.rel (0) target = $region9
    $region8: #{_lambda_.1} parent=1 // pred_region
      %s26 = ssub.s32 18432, 18432
      %27 = vsyncadd [#allocation7], %s26
      %s28 = sshll.u32 [#allocation6], 4
      %s29 = int_to_ptr.vmem [resolvable:$true] %s28
      %34 = dma.hbm_to_vmem [thread:$0]  %s1, 18432, %s29, [#allocation7], 128, 128, 8
    $region9: #{_lambda_.1} parent=1 // pred_fallthru
      _
    // Predicated region
    $region10: #{_lambda_.1} parent=1 // pred_check
      _
    $region11: #{_lambda_.1} parent=1 // pred_check_branch
      %36 = sbr.rel (0) target = $region13
    $region12: #{_lambda_.1} parent=1 // pred_region
      %s38 = ssub.s32 1024, 1024
      %39 = vsyncadd [#allocation7], %s38
      %s40 = sshll.u32 [#allocation8], 4
      %s41 = int_to_ptr.vmem [resolvable:$true] %s40
      %46 = dma.hbm_to_vmem [thread:$0]  %s2, 1024, %s41, [#allocation7], 128, 128, 8
    $region13: #{_lambda_.1} parent=1 // pred_fallthru
      _
    // Predicated region
    $region14: #{_lambda_.1} parent=1 // pred_check
      _
    $region15: #{_lambda_.1} parent=1 // pred_check_branch
      %48 = sbr.rel (0) target = $region17
    $region16: #{_lambda_.1} parent=1 // pred_region
      %49 = dma.done [#allocation4], 2048
    $region17: #{_lambda_.1} parent=1 // pred_fallthru
      _
    // Predicated region
    $region18: #{_lambda_.1} parent=1 // pred_check
      _
    $region19: #{_lambda_.1} parent=1 // pred_check_branch
      %51 = sbr.rel (0) target = $region21
    $region20: #{_lambda_.1} parent=1 // pred_region
      %52 = dma.done [#allocation7], 18432
    $region21: #{_lambda_.1} parent=1 // pred_fallthru
      _
    // Predicated region
    $region22: #{_lambda_.1} parent=1 // pred_check
      _
    $region23: #{_lambda_.1} parent=1 // pred_check_branch
      %54 = sbr.rel (0) target = $region25
    $region24: #{_lambda_.1} parent=1 // pred_region
      %55 = dma.done [#allocation7], 1024
    $region25: #{_lambda_.1} parent=1 // pred_fallthru
      _
    %v56 = vld [vmem:[#allocation3] sm:$0xff]
    %v57 = vld [vmem:[#allocation3 + $0x8] sm:$0xff]
    %v58 = vld [vmem:[#allocation3 + $0x10] sm:$0xff]
    %v59 = vld [vmem:[#allocation3 + $0x18] sm:$0xff]
    %v60 = vld [vmem:[#allocation3 + $0x20] sm:$0xff]
    %v61 = vld [vmem:[#allocation3 + $0x28] sm:$0xff]
    %v62 = vld [vmem:[#allocation3 + $0x30] sm:$0xff]
    %v63 = vld [vmem:[#allocation3 + $0x38] sm:$0xff]
    %v64 = vld [vmem:[#allocation3 + $0x40] sm:$0xff]
    %v65 = vld [vmem:[#allocation3 + $0x48] sm:$0xff]
    %v66 = vld [vmem:[#allocation3 + $0x50] sm:$0xff]
    %v67 = vld [vmem:[#allocation3 + $0x58] sm:$0xff]
    %v68 = vld [vmem:[#allocation3 + $0x60] sm:$0xff]
    %v69 = vld [vmem:[#allocation3 + $0x68] sm:$0xff]
    %v70 = vld [vmem:[#allocation3 + $0x70] sm:$0xff]
    %v71 = vld [vmem:[#allocation3 + $0x78] sm:$0xff]
    %72 = vst [vmem:[#allocation2] sm:$0xff] 0.0
    %73 = vst [vmem:[#allocation2 + $0x8] sm:$0x3] 0.0
    %74 = vst [vmem:[#allocation2 + $0x10] sm:$0xff] 0.0
    %75 = vst [vmem:[#allocation2 + $0x18] sm:$0x3] 0.0
    %76 = vst [vmem:[#allocation2 + $0x20] sm:$0xff] 0.0
    %77 = vst [vmem:[#allocation2 + $0x28] sm:$0x3] 0.0
    %78 = vst [vmem:[#allocation2 + $0x30] sm:$0xff] 0.0
    %79 = vst [vmem:[#allocation2 + $0x38] sm:$0x3] 0.0
    %80 = vst [vmem:[#allocation2 + $0x40] sm:$0xff] 0.0
    %81 = vst [vmem:[#allocation2 + $0x48] sm:$0x3] 0.0
    %82 = vst [vmem:[#allocation2 + $0x50] sm:$0xff] 0.0
    %83 = vst [vmem:[#allocation2 + $0x58] sm:$0x3] 0.0
    %84 = vst [vmem:[#allocation2 + $0x60] sm:$0xff] 0.0
    %85 = vst [vmem:[#allocation2 + $0x68] sm:$0x3] 0.0
    %86 = vst [vmem:[#allocation2 + $0x70] sm:$0xff] 0.0
    %87 = vst [vmem:[#allocation2 + $0x78] sm:$0x3] 0.0
    %88 = vst [vmem:[#allocation2 + $0x80] sm:$0xff] 0.0
    %89 = vst [vmem:[#allocation2 + $0x88] sm:$0x3] 0.0
    %90 = vst [vmem:[#allocation2 + $0x90] sm:$0xff] 0.0
    %91 = vst [vmem:[#allocation2 + $0x98] sm:$0x3] 0.0
    %92 = vst [vmem:[#allocation2 + $0xa0] sm:$0xff] 0.0
    %93 = vst [vmem:[#allocation2 + $0xa8] sm:$0x3] 0.0
    %94 = vst [vmem:[#allocation2 + $0xb0] sm:$0xff] 0.0
    %95 = vst [vmem:[#allocation2 + $0xb8] sm:$0x3] 0.0
    %96 = vst [vmem:[#allocation2 + $0xc0] sm:$0xff] 0.0
    %97 = vst [vmem:[#allocation2 + $0xc8] sm:$0x3] 0.0
    %98 = vst [vmem:[#allocation2 + $0xd0] sm:$0xff] 0.0
    %99 = vst [vmem:[#allocation2 + $0xd8] sm:$0x3] 0.0
    %100 = vst [vmem:[#allocation2 + $0xe0] sm:$0xff] 0.0
    %101 = vst [vmem:[#allocation2 + $0xe8] sm:$0x3] 0.0
    %102 = vst [vmem:[#allocation2 + $0xf0] sm:$0xff] 0.0
    %103 = vst [vmem:[#allocation2 + $0xf8] sm:$0x3] 0.0
    %104 = vst [vmem:[#allocation2 + $0x100] sm:$0xff] 0.0
    %105 = vst [vmem:[#allocation2 + $0x108] sm:$0x3] 0.0
    %106 = vst [vmem:[#allocation2 + $0x110] sm:$0xff] 0.0
    %107 = vst [vmem:[#allocation2 + $0x118] sm:$0x3] 0.0
    %108 = vst [vmem:[#allocation2 + $0x120] sm:$0xff] 0.0
    %109 = vst [vmem:[#allocation2 + $0x128] sm:$0x3] 0.0
    %110 = vst [vmem:[#allocation2 + $0x130] sm:$0xff] 0.0
    %111 = vst [vmem:[#allocation2 + $0x138] sm:$0x3] 0.0
    %v112 = vmax.f32 %v56, 0.0
    %v113 = vmax.f32 %v57, 0.0
    %v114 = vmax.f32 %v58, 0.0
    %v115 = vmax.f32 %v59, 0.0
    %v116 = vmax.f32 %v60, 0.0
    %v117 = vmax.f32 %v61, 0.0
    %v118 = vmax.f32 %v62, 0.0
    %v119 = vmax.f32 %v63, 0.0
    %v120 = vmax.f32 %v64, 0.0
    %v121 = vmax.f32 %v65, 0.0
    %v122 = vmax.f32 %v66, 0.0
    %v123 = vmax.f32 %v67, 0.0
    %v124 = vmax.f32 %v68, 0.0
    %v125 = vmax.f32 %v69, 0.0
    %v126 = vmax.f32 %v70, 0.0
    %v127 = vmax.f32 %v71, 0.0
    %s128 = scalar_lea.vmem [#allocation2], 16
    %129 = vst [vmem:[%s128 + $0x1] sm:$0xff] %v112
    %130 = vst [vmem:[%s128 + $0x11] sm:$0xff] %v113
    %131 = vst [vmem:[%s128 + $0x21] sm:$0xff] %v114
    %132 = vst [vmem:[%s128 + $0x31] sm:$0xff] %v115
    %133 = vst [vmem:[%s128 + $0x41] sm:$0xff] %v116
    %134 = vst [vmem:[%s128 + $0x51] sm:$0xff] %v117
    %135 = vst [vmem:[%s128 + $0x61] sm:$0xff] %v118
    %136 = vst [vmem:[%s128 + $0x71] sm:$0xff] %v119
    %137 = vst [vmem:[%s128 + $0xa1] sm:$0xff] %v120
    %138 = vst [vmem:[%s128 + $0xb1] sm:$0xff] %v121
    %139 = vst [vmem:[%s128 + $0xc1] sm:$0xff] %v122
    %140 = vst [vmem:[%s128 + $0xd1] sm:$0xff] %v123
    %141 = vst [vmem:[%s128 + $0xe1] sm:$0xff] %v124
    %142 = vst [vmem:[%s128 + $0xf1] sm:$0xff] %v125
    %143 = vst [vmem:[%s128 + $0x101] sm:$0xff] %v126
    %144 = vst [vmem:[%s128 + $0x111] sm:$0xff] %v127
    %v145 = vld [vmem:[#allocation2] sm:$0xff]
    %v146 = vld [vmem:[#allocation2 + $0x10] sm:$0xff]
    %v147 = vld [vmem:[#allocation2 + $0x20] sm:$0xff]
    %v148 = vld [vmem:[#allocation2 + $0x30] sm:$0xff]
    %v149 = vld [vmem:[#allocation2 + $0x40] sm:$0xff]
    %v150 = vld [vmem:[#allocation2 + $0x50] sm:$0xff]
    %v151 = vld [vmem:[#allocation2 + $0x60] sm:$0xff]
    %v152 = vld [vmem:[#allocation2 + $0x70] sm:$0xff]
    %v153 = vld [vmem:[#allocation2 + $0xa0] sm:$0xff]
    %v154 = vld [vmem:[#allocation2 + $0xb0] sm:$0xff]
    %v155 = vld [vmem:[#allocation2 + $0xc0] sm:$0xff]
    %v156 = vld [vmem:[#allocation2 + $0xd0] sm:$0xff]
    %v157 = vld [vmem:[#allocation2 + $0xe0] sm:$0xff]
    %v158 = vld [vmem:[#allocation2 + $0xf0] sm:$0xff]
    %v159 = vld [vmem:[#allocation2 + $0x100] sm:$0xff]
    %v160 = vld [vmem:[#allocation2 + $0x110] sm:$0xff]
    %v161 = vld [vmem:[#allocation6] sm:$0xff]
    %v162 = vld [vmem:[#allocation6 + $0x8] sm:$0xff]
    %v163 = vld [vmem:[#allocation6 + $0x10] sm:$0xff]
    %v164 = vld [vmem:[#allocation6 + $0x18] sm:$0xff]
    %v165 = vld [vmem:[#allocation6 + $0x20] sm:$0xff]
    %v166 = vld [vmem:[#allocation6 + $0x28] sm:$0xff]
    %v167 = vld [vmem:[#allocation6 + $0x30] sm:$0xff]
    %v168 = vld [vmem:[#allocation6 + $0x38] sm:$0xff]
    %v169 = vld [vmem:[#allocation6 + $0x40] sm:$0xff]
    %v170 = vld [vmem:[#allocation6 + $0x48] sm:$0xff]
    %v171 = vld [vmem:[#allocation6 + $0x50] sm:$0xff]
    %v172 = vld [vmem:[#allocation6 + $0x58] sm:$0xff]
    %v173 = vld [vmem:[#allocation6 + $0x60] sm:$0xff]
    %v174 = vld [vmem:[#allocation6 + $0x68] sm:$0xff]
    %v175 = vld [vmem:[#allocation6 + $0x70] sm:$0xff]
    %v176 = vld [vmem:[#allocation6 + $0x78] sm:$0xff]
    %v177 = vld [vmem:[#allocation2 + $0x1] sm:$0xff]
    %v178 = vld [vmem:[#allocation2 + $0x11] sm:$0xff]
    %v179 = vld [vmem:[#allocation2 + $0x21] sm:$0xff]
    %v180 = vld [vmem:[#allocation2 + $0x31] sm:$0xff]
    %v181 = vld [vmem:[#allocation2 + $0x41] sm:$0xff]
    %v182 = vld [vmem:[#allocation2 + $0x51] sm:$0xff]
    %v183 = vld [vmem:[#allocation2 + $0x61] sm:$0xff]
    %v184 = vld [vmem:[#allocation2 + $0x71] sm:$0xff]
    %v185 = vld [vmem:[#allocation2 + $0xa1] sm:$0xff]
    %v186 = vld [vmem:[#allocation2 + $0xb1] sm:$0xff]
    %v187 = vld [vmem:[#allocation2 + $0xc1] sm:$0xff]
    %v188 = vld [vmem:[#allocation2 + $0xd1] sm:$0xff]
    %v189 = vld [vmem:[#allocation2 + $0xe1] sm:$0xff]
    %v190 = vld [vmem:[#allocation2 + $0xf1] sm:$0xff]
    %v191 = vld [vmem:[#allocation2 + $0x101] sm:$0xff]
    %v192 = vld [vmem:[#allocation2 + $0x111] sm:$0xff]
    %s193 = scalar_lea.vmem [#allocation6], 128
    %v194 = vld [vmem:[%s193] sm:$0xff]
    %v195 = vld [vmem:[%s193 + $0x8] sm:$0xff]
    %v196 = vld [vmem:[%s193 + $0x10] sm:$0xff]
    %v197 = vld [vmem:[%s193 + $0x18] sm:$0xff]
    %v198 = vld [vmem:[%s193 + $0x20] sm:$0xff]
    %v199 = vld [vmem:[%s193 + $0x28] sm:$0xff]
    %v200 = vld [vmem:[%s193 + $0x30] sm:$0xff]
    %v201 = vld [vmem:[%s193 + $0x38] sm:$0xff]
    %v202 = vld [vmem:[%s193 + $0x40] sm:$0xff]
    %v203 = vld [vmem:[%s193 + $0x48] sm:$0xff]
    %v204 = vld [vmem:[%s193 + $0x50] sm:$0xff]
    %v205 = vld [vmem:[%s193 + $0x58] sm:$0xff]
    %v206 = vld [vmem:[%s193 + $0x60] sm:$0xff]
    %v207 = vld [vmem:[%s193 + $0x68] sm:$0xff]
    %v208 = vld [vmem:[%s193 + $0x70] sm:$0xff]
    %v209 = vld [vmem:[%s193 + $0x78] sm:$0xff]
    %210 = vmatprep.subr.mxu0 0.0
    %211 = vmatpush1.msra.mxu0 %v209
    %212 = vmatprep.subr.mxu0 0.0
    %213 = vmatpush1.msra.mxu0 %v208
    %214 = vmatprep.subr.mxu0 0.0
    %215 = vmatpush1.msra.mxu0 %v207
    %216 = vmatprep.subr.mxu0 0.0
    %217 = vmatpush1.msra.mxu0 %v206
    %218 = vmatprep.subr.mxu0 0.0
    %219 = vmatpush1.msra.mxu0 %v205
    %220 = vmatprep.subr.mxu0 0.0
    %221 = vmatpush1.msra.mxu0 %v204
    %222 = vmatprep.subr.mxu0 0.0
    %223 = vmatpush1.msra.mxu0 %v203
    %224 = vmatprep.subr.mxu0 0.0
    %225 = vmatpush1.msra.mxu0 %v202
    %226 = vmatprep.subr.mxu0 0.0
    %227 = vmatpush1.msra.mxu0 %v201
    %228 = vmatprep.subr.mxu0 0.0
    %229 = vmatpush1.msra.mxu0 %v200
    %230 = vmatprep.subr.mxu0 0.0
    %231 = vmatpush1.msra.mxu0 %v199
    %232 = vmatprep.subr.mxu0 0.0
    %233 = vmatpush1.msra.mxu0 %v198
    %234 = vmatprep.subr.mxu0 0.0
    %235 = vmatpush1.msra.mxu0 %v197
    %236 = vmatprep.subr.mxu0 0.0
    %237 = vmatpush1.msra.mxu0 %v196
    %238 = vmatprep.subr.mxu0 0.0
    %239 = vmatpush1.msra.mxu0 %v195
    %240 = vmatprep.subr.mxu0 0.0
    %241 = vmatpush1.msra.mxu0 %v194
    %242 = vmatprep.subr.mxu0 0.0
    %243 = vmatpush2.msra.mxu0 0.0
    %244 = vmatprep.subr.mxu0 0.0
    %245 = vmatpush2.msra.mxu0 0.0
    %246 = vmatprep.subr.mxu0 0.0
    %247 = vmatpush2.msra.mxu0 0.0
    %248 = vmatprep.subr.mxu0 0.0
    %249 = vmatpush2.msra.mxu0 0.0
    %250 = vmatprep.subr.mxu0 0.0
    %251 = vmatpush2.msra.mxu0 0.0
    %252 = vmatprep.subr.mxu0 0.0
    %253 = vmatpush2.msra.mxu0 0.0
    %254 = vmatprep.subr.mxu0 0.0
    %255 = vmatpush2.msra.mxu0 0.0
    %256 = vmatprep.subr.mxu0 0.0
    %257 = vmatpush2.msra.mxu0 0.0
    %258 = vmatprep.subr.mxu0 0.0
    %259 = vmatpush2.msra.mxu0 0.0
    %260 = vmatprep.subr.mxu0 0.0
    %261 = vmatpush2.msra.mxu0 0.0
    %262 = vmatprep.subr.mxu0 0.0
    %263 = vmatpush2.msra.mxu0 0.0
    %264 = vmatprep.subr.mxu0 0.0
    %265 = vmatpush2.msra.mxu0 0.0
    %266 = vmatprep.subr.mxu0 0.0
    %267 = vmatpush2.msra.mxu0 0.0
    %268 = vmatprep.subr.mxu0 0.0
    %269 = vmatpush2.msra.mxu0 0.0
    %270 = vmatprep.subr.mxu0 0.0
    %271 = vmatpush2.msra.mxu0 0.0
    %272 = vmatprep.subr.mxu0 0.0
    %273 = vmatpush2.msra.mxu0 0.0
    %274 = vmatprep.mubr.f32.mxu0 0.0
    %275 = vmatmul.mubr.f32.gmra.mxu0 %v177
    %v276 = vpop.f32.mrf.mxu0
    %v277 = vadd.f32 0.0, %v276
    %v278 = vpop.f32.mrf.mxu0
    %279 = vmatprep.mubr.f32.mxu0 0.0
    %280 = vmatmul.mubr.f32.gmra.mxu0 %v178
    %v281 = vpop.f32.mrf.mxu0
    %v282 = vadd.f32 0.0, %v281
    %v283 = vpop.f32.mrf.mxu0
    %284 = vmatprep.mubr.f32.mxu0 0.0
    %285 = vmatmul.mubr.f32.gmra.mxu0 %v179
    %v286 = vpop.f32.mrf.mxu0
    %v287 = vadd.f32 0.0, %v286
    %v288 = vpop.f32.mrf.mxu0
    %289 = vmatprep.mubr.f32.mxu0 0.0
    %290 = vmatmul.mubr.f32.gmra.mxu0 %v180
    %v291 = vpop.f32.mrf.mxu0
    %v292 = vadd.f32 0.0, %v291
    %v293 = vpop.f32.mrf.mxu0
    %294 = vmatprep.mubr.f32.mxu0 0.0
    %295 = vmatmul.mubr.f32.gmra.mxu0 %v181
    %v296 = vpop.f32.mrf.mxu0
    %v297 = vadd.f32 0.0, %v296
    %v298 = vpop.f32.mrf.mxu0
    %299 = vmatprep.mubr.f32.mxu0 0.0
    %300 = vmatmul.mubr.f32.gmra.mxu0 %v182
    %v301 = vpop.f32.mrf.mxu0
    %v302 = vadd.f32 0.0, %v301
    %v303 = vpop.f32.mrf.mxu0
    %304 = vmatprep.mubr.f32.mxu0 0.0
    %305 = vmatmul.mubr.f32.gmra.mxu0 %v183
    %v306 = vpop.f32.mrf.mxu0
    %v307 = vadd.f32 0.0, %v306
    %v308 = vpop.f32.mrf.mxu0
    %309 = vmatprep.mubr.f32.mxu0 0.0
    %310 = vmatmul.mubr.f32.gmra.mxu0 %v184
    %v311 = vpop.f32.mrf.mxu0
    %v312 = vadd.f32 0.0, %v311
    %v313 = vpop.f32.mrf.mxu0
    %314 = vmatprep.mubr.f32.mxu0 0.0
    %315 = vmatmul.mubr.f32.gmra.mxu0 %v185
    %v316 = vpop.f32.mrf.mxu0
    %v317 = vadd.f32 0.0, %v316
    %v318 = vpop.f32.mrf.mxu0
    %319 = vmatprep.mubr.f32.mxu0 0.0
    %320 = vmatmul.mubr.f32.gmra.mxu0 %v186
    %v321 = vpop.f32.mrf.mxu0
    %v322 = vadd.f32 0.0, %v321
    %v323 = vpop.f32.mrf.mxu0
    %324 = vmatprep.mubr.f32.mxu0 0.0
    %325 = vmatmul.mubr.f32.gmra.mxu0 %v187
    %v326 = vpop.f32.mrf.mxu0
    %v327 = vadd.f32 0.0, %v326
    %v328 = vpop.f32.mrf.mxu0
    %329 = vmatprep.mubr.f32.mxu0 0.0
    %330 = vmatmul.mubr.f32.gmra.mxu0 %v188
    %v331 = vpop.f32.mrf.mxu0
    %v332 = vadd.f32 0.0, %v331
    %v333 = vpop.f32.mrf.mxu0
    %334 = vmatprep.mubr.f32.mxu0 0.0
    %335 = vmatmul.mubr.f32.gmra.mxu0 %v189
    %v336 = vpop.f32.mrf.mxu0
    %v337 = vadd.f32 0.0, %v336
    %v338 = vpop.f32.mrf.mxu0
    %339 = vmatprep.mubr.f32.mxu0 0.0
    %340 = vmatmul.mubr.f32.gmra.mxu0 %v190
    %v341 = vpop.f32.mrf.mxu0
    %v342 = vadd.f32 0.0, %v341
    %v343 = vpop.f32.mrf.mxu0
    %344 = vmatprep.mubr.f32.mxu0 0.0
    %345 = vmatmul.mubr.f32.gmra.mxu0 %v191
    %v346 = vpop.f32.mrf.mxu0
    %v347 = vadd.f32 0.0, %v346
    %v348 = vpop.f32.mrf.mxu0
    %349 = vmatprep.mubr.f32.mxu0 0.0
    %350 = vmatmul.mubr.f32.gmra.mxu0 %v192
    %v351 = vpop.f32.mrf.mxu0
    %v352 = vadd.f32 0.0, %v351
    %v353 = vpop.f32.mrf.mxu0
    %354 = vdwg.mxu0
    %355 = vmatprep.subr.mxu0 0.0
    %356 = vmatpush1.msra.mxu0 %v176
    %357 = vmatprep.subr.mxu0 0.0
    %358 = vmatpush1.msra.mxu0 %v175
    %359 = vmatprep.subr.mxu0 0.0
    %360 = vmatpush1.msra.mxu0 %v174
    %361 = vmatprep.subr.mxu0 0.0
    %362 = vmatpush1.msra.mxu0 %v173
    %363 = vmatprep.subr.mxu0 0.0
    %364 = vmatpush1.msra.mxu0 %v172
    %365 = vmatprep.subr.mxu0 0.0
    %366 = vmatpush1.msra.mxu0 %v171
    %367 = vmatprep.subr.mxu0 0.0
    %368 = vmatpush1.msra.mxu0 %v170
    %369 = vmatprep.subr.mxu0 0.0
    %370 = vmatpush1.msra.mxu0 %v169
    %371 = vmatprep.subr.mxu0 0.0
    %372 = vmatpush1.msra.mxu0 %v168
    %373 = vmatprep.subr.mxu0 0.0
    %374 = vmatpush1.msra.mxu0 %v167
    %375 = vmatprep.subr.mxu0 0.0
    %376 = vmatpush1.msra.mxu0 %v166
    %377 = vmatprep.subr.mxu0 0.0
    %378 = vmatpush1.msra.mxu0 %v165
    %379 = vmatprep.subr.mxu0 0.0
    %380 = vmatpush1.msra.mxu0 %v164
    %381 = vmatprep.subr.mxu0 0.0
    %382 = vmatpush1.msra.mxu0 %v163
    %383 = vmatprep.subr.mxu0 0.0
    %384 = vmatpush1.msra.mxu0 %v162
    %385 = vmatprep.subr.mxu0 0.0
    %386 = vmatpush1.msra.mxu0 %v161
    %387 = vmatprep.subr.mxu0 0.0
    %388 = vmatpush2.msra.mxu0 0.0
    %389 = vmatprep.subr.mxu0 0.0
    %390 = vmatpush2.msra.mxu0 0.0
    %391 = vmatprep.subr.mxu0 0.0
    %392 = vmatpush2.msra.mxu0 0.0
    %393 = vmatprep.subr.mxu0 0.0
    %394 = vmatpush2.msra.mxu0 0.0
    %395 = vmatprep.subr.mxu0 0.0
    %396 = vmatpush2.msra.mxu0 0.0
    %397 = vmatprep.subr.mxu0 0.0
    %398 = vmatpush2.msra.mxu0 0.0
    %399 = vmatprep.subr.mxu0 0.0
    %400 = vmatpush2.msra.mxu0 0.0
    %401 = vmatprep.subr.mxu0 0.0
    %402 = vmatpush2.msra.mxu0 0.0
    %403 = vmatprep.subr.mxu0 0.0
    %404 = vmatpush2.msra.mxu0 0.0
    %405 = vmatprep.subr.mxu0 0.0
    %406 = vmatpush2.msra.mxu0 0.0
    %407 = vmatprep.subr.mxu0 0.0
    %408 = vmatpush2.msra.mxu0 0.0
    %409 = vmatprep.subr.mxu0 0.0
    %410 = vmatpush2.msra.mxu0 0.0
    %411 = vmatprep.subr.mxu0 0.0
    %412 = vmatpush2.msra.mxu0 0.0
    %413 = vmatprep.subr.mxu0 0.0
    %414 = vmatpush2.msra.mxu0 0.0
    %415 = vmatprep.subr.mxu0 0.0
    %416 = vmatpush2.msra.mxu0 0.0
    %417 = vmatprep.subr.mxu0 0.0
    %418 = vmatpush2.msra.mxu0 0.0
    %419 = vmatprep.mubr.f32.mxu0 0.0
    %420 = vmatmul.mubr.f32.gmra.mxu0 %v145
    %v421 = vpop.f32.mrf.mxu0
    %v422 = vadd.f32 %v277, %v421
    %v423 = vpop.f32.mrf.mxu0
    %424 = vmatprep.mubr.f32.mxu0 0.0
    %425 = vmatmul.mubr.f32.gmra.mxu0 %v146
    %v426 = vpop.f32.mrf.mxu0
    %v427 = vadd.f32 %v282, %v426
    %v428 = vpop.f32.mrf.mxu0
    %429 = vmatprep.mubr.f32.mxu0 0.0
    %430 = vmatmul.mubr.f32.gmra.mxu0 %v147
    %v431 = vpop.f32.mrf.mxu0
    %v432 = vadd.f32 %v287, %v431
    %v433 = vpop.f32.mrf.mxu0
    %434 = vmatprep.mubr.f32.mxu0 0.0
    %435 = vmatmul.mubr.f32.gmra.mxu0 %v148
    %v436 = vpop.f32.mrf.mxu0
    %v437 = vadd.f32 %v292, %v436
    %v438 = vpop.f32.mrf.mxu0
    %439 = vmatprep.mubr.f32.mxu0 0.0
    %440 = vmatmul.mubr.f32.gmra.mxu0 %v149
    %v441 = vpop.f32.mrf.mxu0
    %v442 = vadd.f32 %v297, %v441
    %v443 = vpop.f32.mrf.mxu0
    %444 = vmatprep.mubr.f32.mxu0 0.0
    %445 = vmatmul.mubr.f32.gmra.mxu0 %v150
    %v446 = vpop.f32.mrf.mxu0
    %v447 = vadd.f32 %v302, %v446
    %v448 = vpop.f32.mrf.mxu0
    %449 = vmatprep.mubr.f32.mxu0 0.0
    %450 = vmatmul.mubr.f32.gmra.mxu0 %v151
    %v451 = vpop.f32.mrf.mxu0
    %v452 = vadd.f32 %v307, %v451
    %v453 = vpop.f32.mrf.mxu0
    %454 = vmatprep.mubr.f32.mxu0 0.0
    %455 = vmatmul.mubr.f32.gmra.mxu0 %v152
    %v456 = vpop.f32.mrf.mxu0
    %v457 = vadd.f32 %v312, %v456
    %v458 = vpop.f32.mrf.mxu0
    %459 = vmatprep.mubr.f32.mxu0 0.0
    %460 = vmatmul.mubr.f32.gmra.mxu0 %v153
    %v461 = vpop.f32.mrf.mxu0
    %v462 = vadd.f32 %v317, %v461
    %v463 = vpop.f32.mrf.mxu0
    %464 = vmatprep.mubr.f32.mxu0 0.0
    %465 = vmatmul.mubr.f32.gmra.mxu0 %v154
    %v466 = vpop.f32.mrf.mxu0
    %v467 = vadd.f32 %v322, %v466
    %v468 = vpop.f32.mrf.mxu0
    %469 = vmatprep.mubr.f32.mxu0 0.0
    %470 = vmatmul.mubr.f32.gmra.mxu0 %v155
    %v471 = vpop.f32.mrf.mxu0
    %v472 = vadd.f32 %v327, %v471
    %v473 = vpop.f32.mrf.mxu0
    %474 = vmatprep.mubr.f32.mxu0 0.0
    %475 = vmatmul.mubr.f32.gmra.mxu0 %v156
    %v476 = vpop.f32.mrf.mxu0
    %v477 = vadd.f32 %v332, %v476
    %v478 = vpop.f32.mrf.mxu0
    %479 = vmatprep.mubr.f32.mxu0 0.0
    %480 = vmatmul.mubr.f32.gmra.mxu0 %v157
    %v481 = vpop.f32.mrf.mxu0
    %v482 = vadd.f32 %v337, %v481
    %v483 = vpop.f32.mrf.mxu0
    %484 = vmatprep.mubr.f32.mxu0 0.0
    %485 = vmatmul.mubr.f32.gmra.mxu0 %v158
    %v486 = vpop.f32.mrf.mxu0
    %v487 = vadd.f32 %v342, %v486
    %v488 = vpop.f32.mrf.mxu0
    %489 = vmatprep.mubr.f32.mxu0 0.0
    %490 = vmatmul.mubr.f32.gmra.mxu0 %v159
    %v491 = vpop.f32.mrf.mxu0
    %v492 = vadd.f32 %v347, %v491
    %v493 = vpop.f32.mrf.mxu0
    %494 = vmatprep.mubr.f32.mxu0 0.0
    %495 = vmatmul.mubr.f32.gmra.mxu0 %v160
    %v496 = vpop.f32.mrf.mxu0
    %v497 = vadd.f32 %v352, %v496
    %v498 = vpop.f32.mrf.mxu0
    %499 = vdwg.mxu0
    %v500 = vld [vmem:[#allocation2 + $0x2] sm:$0xff]
    %v501 = vld [vmem:[#allocation2 + $0x12] sm:$0xff]
    %v502 = vld [vmem:[#allocation2 + $0x22] sm:$0xff]
    %v503 = vld [vmem:[#allocation2 + $0x32] sm:$0xff]
    %v504 = vld [vmem:[#allocation2 + $0x42] sm:$0xff]
    %v505 = vld [vmem:[#allocation2 + $0x52] sm:$0xff]
    %v506 = vld [vmem:[#allocation2 + $0x62] sm:$0xff]
    %v507 = vld [vmem:[#allocation2 + $0x72] sm:$0xff]
    %v508 = vld [vmem:[#allocation2 + $0xa2] sm:$0xff]
    %v509 = vld [vmem:[#allocation2 + $0xb2] sm:$0xff]
    %v510 = vld [vmem:[#allocation2 + $0xc2] sm:$0xff]
    %v511 = vld [vmem:[#allocation2 + $0xd2] sm:$0xff]
    %v512 = vld [vmem:[#allocation2 + $0xe2] sm:$0xff]
    %v513 = vld [vmem:[#allocation2 + $0xf2] sm:$0xff]
    %v514 = vld [vmem:[#allocation2 + $0x102] sm:$0xff]
    %v515 = vld [vmem:[#allocation2 + $0x112] sm:$0xff]
    %s516 = scalar_lea.vmem [#allocation6], 256
    %v517 = vld [vmem:[%s516] sm:$0xff]
    %v518 = vld [vmem:[%s516 + $0x8] sm:$0xff]
    %v519 = vld [vmem:[%s516 + $0x10] sm:$0xff]
    %v520 = vld [vmem:[%s516 + $0x18] sm:$0xff]
    %v521 = vld [vmem:[%s516 + $0x20] sm:$0xff]
    %v522 = vld [vmem:[%s516 + $0x28] sm:$0xff]
    %v523 = vld [vmem:[%s516 + $0x30] sm:$0xff]
    %v524 = vld [vmem:[%s516 + $0x38] sm:$0xff]
    %v525 = vld [vmem:[%s516 + $0x40] sm:$0xff]
    %v526 = vld [vmem:[%s516 + $0x48] sm:$0xff]
    %v527 = vld [vmem:[%s516 + $0x50] sm:$0xff]
    %v528 = vld [vmem:[%s516 + $0x58] sm:$0xff]
    %v529 = vld [vmem:[%s516 + $0x60] sm:$0xff]
    %v530 = vld [vmem:[%s516 + $0x68] sm:$0xff]
    %v531 = vld [vmem:[%s516 + $0x70] sm:$0xff]
    %v532 = vld [vmem:[%s516 + $0x78] sm:$0xff]
    %533 = vmatprep.subr.mxu0 0.0
    %534 = vmatpush1.msra.mxu0 %v532
    %535 = vmatprep.subr.mxu0 0.0
    %536 = vmatpush1.msra.mxu0 %v531
    %537 = vmatprep.subr.mxu0 0.0
    %538 = vmatpush1.msra.mxu0 %v530
    %539 = vmatprep.subr.mxu0 0.0
    %540 = vmatpush1.msra.mxu0 %v529
    %541 = vmatprep.subr.mxu0 0.0
    %542 = vmatpush1.msra.mxu0 %v528
    %543 = vmatprep.subr.mxu0 0.0
    %544 = vmatpush1.msra.mxu0 %v527
    %545 = vmatprep.subr.mxu0 0.0
    %546 = vmatpush1.msra.mxu0 %v526
    %547 = vmatprep.subr.mxu0 0.0
    %548 = vmatpush1.msra.mxu0 %v525
    %549 = vmatprep.subr.mxu0 0.0
    %550 = vmatpush1.msra.mxu0 %v524
    %551 = vmatprep.subr.mxu0 0.0
    %552 = vmatpush1.msra.mxu0 %v523
    %553 = vmatprep.subr.mxu0 0.0
    %554 = vmatpush1.msra.mxu0 %v522
    %555 = vmatprep.subr.mxu0 0.0
    %556 = vmatpush1.msra.mxu0 %v521
    %557 = vmatprep.subr.mxu0 0.0
    %558 = vmatpush1.msra.mxu0 %v520
    %559 = vmatprep.subr.mxu0 0.0
    %560 = vmatpush1.msra.mxu0 %v519
    %561 = vmatprep.subr.mxu0 0.0
    %562 = vmatpush1.msra.mxu0 %v518
    %563 = vmatprep.subr.mxu0 0.0
    %564 = vmatpush1.msra.mxu0 %v517
    %565 = vmatprep.subr.mxu0 0.0
    %566 = vmatpush2.msra.mxu0 0.0
    %567 = vmatprep.subr.mxu0 0.0
    %568 = vmatpush2.msra.mxu0 0.0
    %569 = vmatprep.subr.mxu0 0.0
    %570 = vmatpush2.msra.mxu0 0.0
    %571 = vmatprep.subr.mxu0 0.0
    %572 = vmatpush2.msra.mxu0 0.0
    %573 = vmatprep.subr.mxu0 0.0
    %574 = vmatpush2.msra.mxu0 0.0
    %575 = vmatprep.subr.mxu0 0.0
    %576 = vmatpush2.msra.mxu0 0.0
    %577 = vmatprep.subr.mxu0 0.0
    %578 = vmatpush2.msra.mxu0 0.0
    %579 = vmatprep.subr.mxu0 0.0
    %580 = vmatpush2.msra.mxu0 0.0
    %581 = vmatprep.subr.mxu0 0.0
    %582 = vmatpush2.msra.mxu0 0.0
    %583 = vmatprep.subr.mxu0 0.0
    %584 = vmatpush2.msra.mxu0 0.0
    %585 = vmatprep.subr.mxu0 0.0
    %586 = vmatpush2.msra.mxu0 0.0
    %587 = vmatprep.subr.mxu0 0.0
    %588 = vmatpush2.msra.mxu0 0.0
    %589 = vmatprep.subr.mxu0 0.0
    %590 = vmatpush2.msra.mxu0 0.0
    %591 = vmatprep.subr.mxu0 0.0
    %592 = vmatpush2.msra.mxu0 0.0
    %593 = vmatprep.subr.mxu0 0.0
    %594 = vmatpush2.msra.mxu0 0.0
    %595 = vmatprep.subr.mxu0 0.0
    %596 = vmatpush2.msra.mxu0 0.0
    %597 = vmatprep.mubr.f32.mxu0 0.0
    %598 = vmatmul.mubr.f32.gmra.mxu0 %v500
    %v599 = vpop.f32.mrf.mxu0
    %v600 = vadd.f32 0.0, %v599
    %v601 = vpop.f32.mrf.mxu0
    %602 = vmatprep.mubr.f32.mxu0 0.0
    %603 = vmatmul.mubr.f32.gmra.mxu0 %v501
    %v604 = vpop.f32.mrf.mxu0
    %v605 = vadd.f32 0.0, %v604
    %v606 = vpop.f32.mrf.mxu0
    %607 = vmatprep.mubr.f32.mxu0 0.0
    %608 = vmatmul.mubr.f32.gmra.mxu0 %v502
    %v609 = vpop.f32.mrf.mxu0
    %v610 = vadd.f32 0.0, %v609
    %v611 = vpop.f32.mrf.mxu0
    %612 = vmatprep.mubr.f32.mxu0 0.0
    %613 = vmatmul.mubr.f32.gmra.mxu0 %v503
    %v614 = vpop.f32.mrf.mxu0
    %v615 = vadd.f32 0.0, %v614
    %v616 = vpop.f32.mrf.mxu0
    %617 = vmatprep.mubr.f32.mxu0 0.0
    %618 = vmatmul.mubr.f32.gmra.mxu0 %v504
    %v619 = vpop.f32.mrf.mxu0
    %v620 = vadd.f32 0.0, %v619
    %v621 = vpop.f32.mrf.mxu0
    %622 = vmatprep.mubr.f32.mxu0 0.0
    %623 = vmatmul.mubr.f32.gmra.mxu0 %v505
    %v624 = vpop.f32.mrf.mxu0
    %v625 = vadd.f32 0.0, %v624
    %v626 = vpop.f32.mrf.mxu0
    %627 = vmatprep.mubr.f32.mxu0 0.0
    %628 = vmatmul.mubr.f32.gmra.mxu0 %v506
    %v629 = vpop.f32.mrf.mxu0
    %v630 = vadd.f32 0.0, %v629
    %v631 = vpop.f32.mrf.mxu0
    %632 = vmatprep.mubr.f32.mxu0 0.0
    %633 = vmatmul.mubr.f32.gmra.mxu0 %v507
    %v634 = vpop.f32.mrf.mxu0
    %v635 = vadd.f32 0.0, %v634
    %v636 = vpop.f32.mrf.mxu0
    %637 = vmatprep.mubr.f32.mxu0 0.0
    %638 = vmatmul.mubr.f32.gmra.mxu0 %v508
    %v639 = vpop.f32.mrf.mxu0
    %v640 = vadd.f32 0.0, %v639
    %v641 = vpop.f32.mrf.mxu0
    %642 = vmatprep.mubr.f32.mxu0 0.0
    %643 = vmatmul.mubr.f32.gmra.mxu0 %v509
    %v644 = vpop.f32.mrf.mxu0
    %v645 = vadd.f32 0.0, %v644
    %v646 = vpop.f32.mrf.mxu0
    %647 = vmatprep.mubr.f32.mxu0 0.0
    %648 = vmatmul.mubr.f32.gmra.mxu0 %v510
    %v649 = vpop.f32.mrf.mxu0
    %v650 = vadd.f32 0.0, %v649
    %v651 = vpop.f32.mrf.mxu0
    %652 = vmatprep.mubr.f32.mxu0 0.0
    %653 = vmatmul.mubr.f32.gmra.mxu0 %v511
    %v654 = vpop.f32.mrf.mxu0
    %v655 = vadd.f32 0.0, %v654
    %v656 = vpop.f32.mrf.mxu0
    %657 = vmatprep.mubr.f32.mxu0 0.0
    %658 = vmatmul.mubr.f32.gmra.mxu0 %v512
    %v659 = vpop.f32.mrf.mxu0
    %v660 = vadd.f32 0.0, %v659
    %v661 = vpop.f32.mrf.mxu0
    %662 = vmatprep.mubr.f32.mxu0 0.0
    %663 = vmatmul.mubr.f32.gmra.mxu0 %v513
    %v664 = vpop.f32.mrf.mxu0
    %v665 = vadd.f32 0.0, %v664
    %v666 = vpop.f32.mrf.mxu0
    %667 = vmatprep.mubr.f32.mxu0 0.0
    %668 = vmatmul.mubr.f32.gmra.mxu0 %v514
    %v669 = vpop.f32.mrf.mxu0
    %v670 = vadd.f32 0.0, %v669
    %v671 = vpop.f32.mrf.mxu0
    %672 = vmatprep.mubr.f32.mxu0 0.0
    %673 = vmatmul.mubr.f32.gmra.mxu0 %v515
    %v674 = vpop.f32.mrf.mxu0
    %v675 = vadd.f32 0.0, %v674
    %v676 = vpop.f32.mrf.mxu0
    %677 = vdwg.mxu0
    %v678 = vadd.f32 %v422, %v600
    %v679 = vadd.f32 %v427, %v605
    %v680 = vadd.f32 %v432, %v610
    %v681 = vadd.f32 %v437, %v615
    %v682 = vadd.f32 %v442, %v620
    %v683 = vadd.f32 %v447, %v625
    %v684 = vadd.f32 %v452, %v630
    %v685 = vadd.f32 %v457, %v635
    %v686 = vadd.f32 %v462, %v640
    %v687 = vadd.f32 %v467, %v645
    %v688 = vadd.f32 %v472, %v650
    %v689 = vadd.f32 %v477, %v655
    %v690 = vadd.f32 %v482, %v660
    %v691 = vadd.f32 %v487, %v665
    %v692 = vadd.f32 %v492, %v670
    %v693 = vadd.f32 %v497, %v675
    %v694 = vld [vmem:[%s128] sm:$0xff]
    %v695 = vld [vmem:[%s128 + $0x10] sm:$0xff]
    %v696 = vld [vmem:[%s128 + $0x20] sm:$0xff]
    %v697 = vld [vmem:[%s128 + $0x30] sm:$0xff]
    %v698 = vld [vmem:[%s128 + $0x40] sm:$0xff]
    %v699 = vld [vmem:[%s128 + $0x50] sm:$0xff]
    %v700 = vld [vmem:[%s128 + $0x60] sm:$0xff]
    %v701 = vld [vmem:[%s128 + $0x70] sm:$0xff]
    %v702 = vld [vmem:[%s128 + $0xa0] sm:$0xff]
    %v703 = vld [vmem:[%s128 + $0xb0] sm:$0xff]
    %v704 = vld [vmem:[%s128 + $0xc0] sm:$0xff]
    %v705 = vld [vmem:[%s128 + $0xd0] sm:$0xff]
    %v706 = vld [vmem:[%s128 + $0xe0] sm:$0xff]
    %v707 = vld [vmem:[%s128 + $0xf0] sm:$0xff]
    %v708 = vld [vmem:[%s128 + $0x100] sm:$0xff]
    %v709 = vld [vmem:[%s128 + $0x110] sm:$0xff]
    %s710 = scalar_lea.vmem [#allocation6], 384
    %v711 = vld [vmem:[%s710] sm:$0xff]
    %v712 = vld [vmem:[%s710 + $0x8] sm:$0xff]
    %v713 = vld [vmem:[%s710 + $0x10] sm:$0xff]
    %v714 = vld [vmem:[%s710 + $0x18] sm:$0xff]
    %v715 = vld [vmem:[%s710 + $0x20] sm:$0xff]
    %v716 = vld [vmem:[%s710 + $0x28] sm:$0xff]
    %v717 = vld [vmem:[%s710 + $0x30] sm:$0xff]
    %v718 = vld [vmem:[%s710 + $0x38] sm:$0xff]
    %v719 = vld [vmem:[%s710 + $0x40] sm:$0xff]
    %v720 = vld [vmem:[%s710 + $0x48] sm:$0xff]
    %v721 = vld [vmem:[%s710 + $0x50] sm:$0xff]
    %v722 = vld [vmem:[%s710 + $0x58] sm:$0xff]
    %v723 = vld [vmem:[%s710 + $0x60] sm:$0xff]
    %v724 = vld [vmem:[%s710 + $0x68] sm:$0xff]
    %v725 = vld [vmem:[%s710 + $0x70] sm:$0xff]
    %v726 = vld [vmem:[%s710 + $0x78] sm:$0xff]
    %727 = vmatprep.subr.mxu0 0.0
    %728 = vmatpush1.msra.mxu0 %v726
    %729 = vmatprep.subr.mxu0 0.0
    %730 = vmatpush1.msra.mxu0 %v725
    %731 = vmatprep.subr.mxu0 0.0
    %732 = vmatpush1.msra.mxu0 %v724
    %733 = vmatprep.subr.mxu0 0.0
    %734 = vmatpush1.msra.mxu0 %v723
    %735 = vmatprep.subr.mxu0 0.0
    %736 = vmatpush1.msra.mxu0 %v722
    %737 = vmatprep.subr.mxu0 0.0
    %738 = vmatpush1.msra.mxu0 %v721
    %739 = vmatprep.subr.mxu0 0.0
    %740 = vmatpush1.msra.mxu0 %v720
    %741 = vmatprep.subr.mxu0 0.0
    %742 = vmatpush1.msra.mxu0 %v719
    %743 = vmatprep.subr.mxu0 0.0
    %744 = vmatpush1.msra.mxu0 %v718
    %745 = vmatprep.subr.mxu0 0.0
    %746 = vmatpush1.msra.mxu0 %v717
    %747 = vmatprep.subr.mxu0 0.0
    %748 = vmatpush1.msra.mxu0 %v716
    %749 = vmatprep.subr.mxu0 0.0
    %750 = vmatpush1.msra.mxu0 %v715
    %751 = vmatprep.subr.mxu0 0.0
    %752 = vmatpush1.msra.mxu0 %v714
    %753 = vmatprep.subr.mxu0 0.0
    %754 = vmatpush1.msra.mxu0 %v713
    %755 = vmatprep.subr.mxu0 0.0
    %756 = vmatpush1.msra.mxu0 %v712
    %757 = vmatprep.subr.mxu0 0.0
    %758 = vmatpush1.msra.mxu0 %v711
    %759 = vmatprep.subr.mxu0 0.0
    %760 = vmatpush2.msra.mxu0 0.0
    %761 = vmatprep.subr.mxu0 0.0
    %762 = vmatpush2.msra.mxu0 0.0
    %763 = vmatprep.subr.mxu0 0.0
    %764 = vmatpush2.msra.mxu0 0.0
    %765 = vmatprep.subr.mxu0 0.0
    %766 = vmatpush2.msra.mxu0 0.0
    %767 = vmatprep.subr.mxu0 0.0
    %768 = vmatpush2.msra.mxu0 0.0
    %769 = vmatprep.subr.mxu0 0.0
    %770 = vmatpush2.msra.mxu0 0.0
    %771 = vmatprep.subr.mxu0 0.0
    %772 = vmatpush2.msra.mxu0 0.0
    %773 = vmatprep.subr.mxu0 0.0
    %774 = vmatpush2.msra.mxu0 0.0
    %775 = vmatprep.subr.mxu0 0.0
    %776 = vmatpush2.msra.mxu0 0.0
    %777 = vmatprep.subr.mxu0 0.0
    %778 = vmatpush2.msra.mxu0 0.0
    %779 = vmatprep.subr.mxu0 0.0
    %780 = vmatpush2.msra.mxu0 0.0
    %781 = vmatprep.subr.mxu0 0.0
    %782 = vmatpush2.msra.mxu0 0.0
    %783 = vmatprep.subr.mxu0 0.0
    %784 = vmatpush2.msra.mxu0 0.0
    %785 = vmatprep.subr.mxu0 0.0
    %786 = vmatpush2.msra.mxu0 0.0
    %787 = vmatprep.subr.mxu0 0.0
    %788 = vmatpush2.msra.mxu0 0.0
    %789 = vmatprep.subr.mxu0 0.0
    %790 = vmatpush2.msra.mxu0 0.0
    %791 = vmatprep.mubr.f32.mxu0 0.0
    %792 = vmatmul.mubr.f32.gmra.mxu0 %v694
    %v793 = vpop.f32.mrf.mxu0
    %v794 = vadd.f32 0.0, %v793
    %v795 = vpop.f32.mrf.mxu0
    %796 = vmatprep.mubr.f32.mxu0 0.0
    %797 = vmatmul.mubr.f32.gmra.mxu0 %v695
    %v798 = vpop.f32.mrf.mxu0
    %v799 = vadd.f32 0.0, %v798
    %v800 = vpop.f32.mrf.mxu0
    %801 = vmatprep.mubr.f32.mxu0 0.0
    %802 = vmatmul.mubr.f32.gmra.mxu0 %v696
    %v803 = vpop.f32.mrf.mxu0
    %v804 = vadd.f32 0.0, %v803
    %v805 = vpop.f32.mrf.mxu0
    %806 = vmatprep.mubr.f32.mxu0 0.0
    %807 = vmatmul.mubr.f32.gmra.mxu0 %v697
    %v808 = vpop.f32.mrf.mxu0
    %v809 = vadd.f32 0.0, %v808
    %v810 = vpop.f32.mrf.mxu0
    %811 = vmatprep.mubr.f32.mxu0 0.0
    %812 = vmatmul.mubr.f32.gmra.mxu0 %v698
    %v813 = vpop.f32.mrf.mxu0
    %v814 = vadd.f32 0.0, %v813
    %v815 = vpop.f32.mrf.mxu0
    %816 = vmatprep.mubr.f32.mxu0 0.0
    %817 = vmatmul.mubr.f32.gmra.mxu0 %v699
    %v818 = vpop.f32.mrf.mxu0
    %v819 = vadd.f32 0.0, %v818
    %v820 = vpop.f32.mrf.mxu0
    %821 = vmatprep.mubr.f32.mxu0 0.0
    %822 = vmatmul.mubr.f32.gmra.mxu0 %v700
    %v823 = vpop.f32.mrf.mxu0
    %v824 = vadd.f32 0.0, %v823
    %v825 = vpop.f32.mrf.mxu0
    %826 = vmatprep.mubr.f32.mxu0 0.0
    %827 = vmatmul.mubr.f32.gmra.mxu0 %v701
    %v828 = vpop.f32.mrf.mxu0
    %v829 = vadd.f32 0.0, %v828
    %v830 = vpop.f32.mrf.mxu0
    %831 = vmatprep.mubr.f32.mxu0 0.0
    %832 = vmatmul.mubr.f32.gmra.mxu0 %v702
    %v833 = vpop.f32.mrf.mxu0
    %v834 = vadd.f32 0.0, %v833
    %v835 = vpop.f32.mrf.mxu0
    %836 = vmatprep.mubr.f32.mxu0 0.0
    %837 = vmatmul.mubr.f32.gmra.mxu0 %v703
    %v838 = vpop.f32.mrf.mxu0
    %v839 = vadd.f32 0.0, %v838
    %v840 = vpop.f32.mrf.mxu0
    %841 = vmatprep.mubr.f32.mxu0 0.0
    %842 = vmatmul.mubr.f32.gmra.mxu0 %v704
    %v843 = vpop.f32.mrf.mxu0
    %v844 = vadd.f32 0.0, %v843
    %v845 = vpop.f32.mrf.mxu0
    %846 = vmatprep.mubr.f32.mxu0 0.0
    %847 = vmatmul.mubr.f32.gmra.mxu0 %v705
    %v848 = vpop.f32.mrf.mxu0
    %v849 = vadd.f32 0.0, %v848
    %v850 = vpop.f32.mrf.mxu0
    %851 = vmatprep.mubr.f32.mxu0 0.0
    %852 = vmatmul.mubr.f32.gmra.mxu0 %v706
    %v853 = vpop.f32.mrf.mxu0
    %v854 = vadd.f32 0.0, %v853
    %v855 = vpop.f32.mrf.mxu0
    %856 = vmatprep.mubr.f32.mxu0 0.0
    %857 = vmatmul.mubr.f32.gmra.mxu0 %v707
    %v858 = vpop.f32.mrf.mxu0
    %v859 = vadd.f32 0.0, %v858
    %v860 = vpop.f32.mrf.mxu0
    %861 = vmatprep.mubr.f32.mxu0 0.0
    %862 = vmatmul.mubr.f32.gmra.mxu0 %v708
    %v863 = vpop.f32.mrf.mxu0
    %v864 = vadd.f32 0.0, %v863
    %v865 = vpop.f32.mrf.mxu0
    %866 = vmatprep.mubr.f32.mxu0 0.0
    %867 = vmatmul.mubr.f32.gmra.mxu0 %v709
    %v868 = vpop.f32.mrf.mxu0
    %v869 = vadd.f32 0.0, %v868
    %v870 = vpop.f32.mrf.mxu0
    %871 = vdwg.mxu0
    %v872 = vadd.f32 %v678, %v794
    %v873 = vadd.f32 %v679, %v799
    %v874 = vadd.f32 %v680, %v804
    %v875 = vadd.f32 %v681, %v809
    %v876 = vadd.f32 %v682, %v814
    %v877 = vadd.f32 %v683, %v819
    %v878 = vadd.f32 %v684, %v824
    %v879 = vadd.f32 %v685, %v829
    %v880 = vadd.f32 %v686, %v834
    %v881 = vadd.f32 %v687, %v839
    %v882 = vadd.f32 %v688, %v844
    %v883 = vadd.f32 %v689, %v849
    %v884 = vadd.f32 %v690, %v854
    %v885 = vadd.f32 %v691, %v859
    %v886 = vadd.f32 %v692, %v864
    %v887 = vadd.f32 %v693, %v869
    %v888 = vld [vmem:[%s128 + $0x1] sm:$0xff]
    %v889 = vld [vmem:[%s128 + $0x11] sm:$0xff]
    %v890 = vld [vmem:[%s128 + $0x21] sm:$0xff]
    %v891 = vld [vmem:[%s128 + $0x31] sm:$0xff]
    %v892 = vld [vmem:[%s128 + $0x41] sm:$0xff]
    %v893 = vld [vmem:[%s128 + $0x51] sm:$0xff]
    %v894 = vld [vmem:[%s128 + $0x61] sm:$0xff]
    %v895 = vld [vmem:[%s128 + $0x71] sm:$0xff]
    %v896 = vld [vmem:[%s128 + $0xa1] sm:$0xff]
    %v897 = vld [vmem:[%s128 + $0xb1] sm:$0xff]
    %v898 = vld [vmem:[%s128 + $0xc1] sm:$0xff]
    %v899 = vld [vmem:[%s128 + $0xd1] sm:$0xff]
    %v900 = vld [vmem:[%s128 + $0xe1] sm:$0xff]
    %v901 = vld [vmem:[%s128 + $0xf1] sm:$0xff]
    %v902 = vld [vmem:[%s128 + $0x101] sm:$0xff]
    %v903 = vld [vmem:[%s128 + $0x111] sm:$0xff]
    %s904 = scalar_lea.vmem [#allocation6], 512
    %v905 = vld [vmem:[%s904] sm:$0xff]
    %v906 = vld [vmem:[%s904 + $0x8] sm:$0xff]
    %v907 = vld [vmem:[%s904 + $0x10] sm:$0xff]
    %v908 = vld [vmem:[%s904 + $0x18] sm:$0xff]
    %v909 = vld [vmem:[%s904 + $0x20] sm:$0xff]
    %v910 = vld [vmem:[%s904 + $0x28] sm:$0xff]
    %v911 = vld [vmem:[%s904 + $0x30] sm:$0xff]
    %v912 = vld [vmem:[%s904 + $0x38] sm:$0xff]
    %v913 = vld [vmem:[%s904 + $0x40] sm:$0xff]
    %v914 = vld [vmem:[%s904 + $0x48] sm:$0xff]
    %v915 = vld [vmem:[%s904 + $0x50] sm:$0xff]
    %v916 = vld [vmem:[%s904 + $0x58] sm:$0xff]
    %v917 = vld [vmem:[%s904 + $0x60] sm:$0xff]
    %v918 = vld [vmem:[%s904 + $0x68] sm:$0xff]
    %v919 = vld [vmem:[%s904 + $0x70] sm:$0xff]
    %v920 = vld [vmem:[%s904 + $0x78] sm:$0xff]
    %921 = vmatprep.subr.mxu0 0.0
    %922 = vmatpush1.msra.mxu0 %v920
    %923 = vmatprep.subr.mxu0 0.0
    %924 = vmatpush1.msra.mxu0 %v919
    %925 = vmatprep.subr.mxu0 0.0
    %926 = vmatpush1.msra.mxu0 %v918
    %927 = vmatprep.subr.mxu0 0.0
    %928 = vmatpush1.msra.mxu0 %v917
    %929 = vmatprep.subr.mxu0 0.0
    %930 = vmatpush1.msra.mxu0 %v916
    %931 = vmatprep.subr.mxu0 0.0
    %932 = vmatpush1.msra.mxu0 %v915
    %933 = vmatprep.subr.mxu0 0.0
    %934 = vmatpush1.msra.mxu0 %v914
    %935 = vmatprep.subr.mxu0 0.0
    %936 = vmatpush1.msra.mxu0 %v913
    %937 = vmatprep.subr.mxu0 0.0
    %938 = vmatpush1.msra.mxu0 %v912
    %939 = vmatprep.subr.mxu0 0.0
    %940 = vmatpush1.msra.mxu0 %v911
    %941 = vmatprep.subr.mxu0 0.0
    %942 = vmatpush1.msra.mxu0 %v910
    %943 = vmatprep.subr.mxu0 0.0
    %944 = vmatpush1.msra.mxu0 %v909
    %945 = vmatprep.subr.mxu0 0.0
    %946 = vmatpush1.msra.mxu0 %v908
    %947 = vmatprep.subr.mxu0 0.0
    %948 = vmatpush1.msra.mxu0 %v907
    %949 = vmatprep.subr.mxu0 0.0
    %950 = vmatpush1.msra.mxu0 %v906
    %951 = vmatprep.subr.mxu0 0.0
    %952 = vmatpush1.msra.mxu0 %v905
    %953 = vmatprep.subr.mxu0 0.0
    %954 = vmatpush2.msra.mxu0 0.0
    %955 = vmatprep.subr.mxu0 0.0
    %956 = vmatpush2.msra.mxu0 0.0
    %957 = vmatprep.subr.mxu0 0.0
    %958 = vmatpush2.msra.mxu0 0.0
    %959 = vmatprep.subr.mxu0 0.0
    %960 = vmatpush2.msra.mxu0 0.0
    %961 = vmatprep.subr.mxu0 0.0
    %962 = vmatpush2.msra.mxu0 0.0
    %963 = vmatprep.subr.mxu0 0.0
    %964 = vmatpush2.msra.mxu0 0.0
    %965 = vmatprep.subr.mxu0 0.0
    %966 = vmatpush2.msra.mxu0 0.0
    %967 = vmatprep.subr.mxu0 0.0
    %968 = vmatpush2.msra.mxu0 0.0
    %969 = vmatprep.subr.mxu0 0.0
    %970 = vmatpush2.msra.mxu0 0.0
    %971 = vmatprep.subr.mxu0 0.0
    %972 = vmatpush2.msra.mxu0 0.0
    %973 = vmatprep.subr.mxu0 0.0
    %974 = vmatpush2.msra.mxu0 0.0
    %975 = vmatprep.subr.mxu0 0.0
    %976 = vmatpush2.msra.mxu0 0.0
    %977 = vmatprep.subr.mxu0 0.0
    %978 = vmatpush2.msra.mxu0 0.0
    %979 = vmatprep.subr.mxu0 0.0
    %980 = vmatpush2.msra.mxu0 0.0
    %981 = vmatprep.subr.mxu0 0.0
    %982 = vmatpush2.msra.mxu0 0.0
    %983 = vmatprep.subr.mxu0 0.0
    %984 = vmatpush2.msra.mxu0 0.0
    %985 = vmatprep.mubr.f32.mxu0 0.0
    %986 = vmatmul.mubr.f32.gmra.mxu0 %v888
    %v987 = vpop.f32.mrf.mxu0
    %v988 = vadd.f32 0.0, %v987
    %v989 = vpop.f32.mrf.mxu0
    %990 = vmatprep.mubr.f32.mxu0 0.0
    %991 = vmatmul.mubr.f32.gmra.mxu0 %v889
    %v992 = vpop.f32.mrf.mxu0
    %v993 = vadd.f32 0.0, %v992
    %v994 = vpop.f32.mrf.mxu0
    %995 = vmatprep.mubr.f32.mxu0 0.0
    %996 = vmatmul.mubr.f32.gmra.mxu0 %v890
    %v997 = vpop.f32.mrf.mxu0
    %v998 = vadd.f32 0.0, %v997
    %v999 = vpop.f32.mrf.mxu0
    %1000 = vmatprep.mubr.f32.mxu0 0.0
    %1001 = vmatmul.mubr.f32.gmra.mxu0 %v891
    %v1002 = vpop.f32.mrf.mxu0
    %v1003 = vadd.f32 0.0, %v1002
    %v1004 = vpop.f32.mrf.mxu0
    %1005 = vmatprep.mubr.f32.mxu0 0.0
    %1006 = vmatmul.mubr.f32.gmra.mxu0 %v892
    %v1007 = vpop.f32.mrf.mxu0
    %v1008 = vadd.f32 0.0, %v1007
    %v1009 = vpop.f32.mrf.mxu0
    %1010 = vmatprep.mubr.f32.mxu0 0.0
    %1011 = vmatmul.mubr.f32.gmra.mxu0 %v893
    %v1012 = vpop.f32.mrf.mxu0
    %v1013 = vadd.f32 0.0, %v1012
    %v1014 = vpop.f32.mrf.mxu0
    %1015 = vmatprep.mubr.f32.mxu0 0.0
    %1016 = vmatmul.mubr.f32.gmra.mxu0 %v894
    %v1017 = vpop.f32.mrf.mxu0
    %v1018 = vadd.f32 0.0, %v1017
    %v1019 = vpop.f32.mrf.mxu0
    %1020 = vmatprep.mubr.f32.mxu0 0.0
    %1021 = vmatmul.mubr.f32.gmra.mxu0 %v895
    %v1022 = vpop.f32.mrf.mxu0
    %v1023 = vadd.f32 0.0, %v1022
    %v1024 = vpop.f32.mrf.mxu0
    %1025 = vmatprep.mubr.f32.mxu0 0.0
    %1026 = vmatmul.mubr.f32.gmra.mxu0 %v896
    %v1027 = vpop.f32.mrf.mxu0
    %v1028 = vadd.f32 0.0, %v1027
    %v1029 = vpop.f32.mrf.mxu0
    %1030 = vmatprep.mubr.f32.mxu0 0.0
    %1031 = vmatmul.mubr.f32.gmra.mxu0 %v897
    %v1032 = vpop.f32.mrf.mxu0
    %v1033 = vadd.f32 0.0, %v1032
    %v1034 = vpop.f32.mrf.mxu0
    %1035 = vmatprep.mubr.f32.mxu0 0.0
    %1036 = vmatmul.mubr.f32.gmra.mxu0 %v898
    %v1037 = vpop.f32.mrf.mxu0
    %v1038 = vadd.f32 0.0, %v1037
    %v1039 = vpop.f32.mrf.mxu0
    %1040 = vmatprep.mubr.f32.mxu0 0.0
    %1041 = vmatmul.mubr.f32.gmra.mxu0 %v899
    %v1042 = vpop.f32.mrf.mxu0
    %v1043 = vadd.f32 0.0, %v1042
    %v1044 = vpop.f32.mrf.mxu0
    %1045 = vmatprep.mubr.f32.mxu0 0.0
    %1046 = vmatmul.mubr.f32.gmra.mxu0 %v900
    %v1047 = vpop.f32.mrf.mxu0
    %v1048 = vadd.f32 0.0, %v1047
    %v1049 = vpop.f32.mrf.mxu0
    %1050 = vmatprep.mubr.f32.mxu0 0.0
    %1051 = vmatmul.mubr.f32.gmra.mxu0 %v901
    %v1052 = vpop.f32.mrf.mxu0
    %v1053 = vadd.f32 0.0, %v1052
    %v1054 = vpop.f32.mrf.mxu0
    %1055 = vmatprep.mubr.f32.mxu0 0.0
    %1056 = vmatmul.mubr.f32.gmra.mxu0 %v902
    %v1057 = vpop.f32.mrf.mxu0
    %v1058 = vadd.f32 0.0, %v1057
    %v1059 = vpop.f32.mrf.mxu0
    %1060 = vmatprep.mubr.f32.mxu0 0.0
    %1061 = vmatmul.mubr.f32.gmra.mxu0 %v903
    %v1062 = vpop.f32.mrf.mxu0
    %v1063 = vadd.f32 0.0, %v1062
    %v1064 = vpop.f32.mrf.mxu0
    %1065 = vdwg.mxu0
    %v1066 = vadd.f32 %v872, %v988
    %v1067 = vadd.f32 %v873, %v993
    %v1068 = vadd.f32 %v874, %v998
    %v1069 = vadd.f32 %v875, %v1003
    %v1070 = vadd.f32 %v876, %v1008
    %v1071 = vadd.f32 %v877, %v1013
    %v1072 = vadd.f32 %v878, %v1018
    %v1073 = vadd.f32 %v879, %v1023
    %v1074 = vadd.f32 %v880, %v1028
    %v1075 = vadd.f32 %v881, %v1033
    %v1076 = vadd.f32 %v882, %v1038
    %v1077 = vadd.f32 %v883, %v1043
    %v1078 = vadd.f32 %v884, %v1048
    %v1079 = vadd.f32 %v885, %v1053
    %v1080 = vadd.f32 %v886, %v1058
    %v1081 = vadd.f32 %v887, %v1063
    %v1082 = vld [vmem:[%s128 + $0x2] sm:$0xff]
    %v1083 = vld [vmem:[%s128 + $0x12] sm:$0xff]
    %v1084 = vld [vmem:[%s128 + $0x22] sm:$0xff]
    %v1085 = vld [vmem:[%s128 + $0x32] sm:$0xff]
    %v1086 = vld [vmem:[%s128 + $0x42] sm:$0xff]
    %v1087 = vld [vmem:[%s128 + $0x52] sm:$0xff]
    %v1088 = vld [vmem:[%s128 + $0x62] sm:$0xff]
    %v1089 = vld [vmem:[%s128 + $0x72] sm:$0xff]
    %v1090 = vld [vmem:[%s128 + $0xa2] sm:$0xff]
    %v1091 = vld [vmem:[%s128 + $0xb2] sm:$0xff]
    %v1092 = vld [vmem:[%s128 + $0xc2] sm:$0xff]
    %v1093 = vld [vmem:[%s128 + $0xd2] sm:$0xff]
    %v1094 = vld [vmem:[%s128 + $0xe2] sm:$0xff]
    %v1095 = vld [vmem:[%s128 + $0xf2] sm:$0xff]
    %v1096 = vld [vmem:[%s128 + $0x102] sm:$0xff]
    %v1097 = vld [vmem:[%s128 + $0x112] sm:$0xff]
    %s1098 = scalar_lea.vmem [#allocation6], 640
    %v1099 = vld [vmem:[%s1098] sm:$0xff]
    %v1100 = vld [vmem:[%s1098 + $0x8] sm:$0xff]
    %v1101 = vld [vmem:[%s1098 + $0x10] sm:$0xff]
    %v1102 = vld [vmem:[%s1098 + $0x18] sm:$0xff]
    %v1103 = vld [vmem:[%s1098 + $0x20] sm:$0xff]
    %v1104 = vld [vmem:[%s1098 + $0x28] sm:$0xff]
    %v1105 = vld [vmem:[%s1098 + $0x30] sm:$0xff]
    %v1106 = vld [vmem:[%s1098 + $0x38] sm:$0xff]
    %v1107 = vld [vmem:[%s1098 + $0x40] sm:$0xff]
    %v1108 = vld [vmem:[%s1098 + $0x48] sm:$0xff]
    %v1109 = vld [vmem:[%s1098 + $0x50] sm:$0xff]
    %v1110 = vld [vmem:[%s1098 + $0x58] sm:$0xff]
    %v1111 = vld [vmem:[%s1098 + $0x60] sm:$0xff]
    %v1112 = vld [vmem:[%s1098 + $0x68] sm:$0xff]
    %v1113 = vld [vmem:[%s1098 + $0x70] sm:$0xff]
    %v1114 = vld [vmem:[%s1098 + $0x78] sm:$0xff]
    %1115 = vmatprep.subr.mxu0 0.0
    %1116 = vmatpush1.msra.mxu0 %v1114
    %1117 = vmatprep.subr.mxu0 0.0
    %1118 = vmatpush1.msra.mxu0 %v1113
    %1119 = vmatprep.subr.mxu0 0.0
    %1120 = vmatpush1.msra.mxu0 %v1112
    %1121 = vmatprep.subr.mxu0 0.0
    %1122 = vmatpush1.msra.mxu0 %v1111
    %1123 = vmatprep.subr.mxu0 0.0
    %1124 = vmatpush1.msra.mxu0 %v1110
    %1125 = vmatprep.subr.mxu0 0.0
    %1126 = vmatpush1.msra.mxu0 %v1109
    %1127 = vmatprep.subr.mxu0 0.0
    %1128 = vmatpush1.msra.mxu0 %v1108
    %1129 = vmatprep.subr.mxu0 0.0
    %1130 = vmatpush1.msra.mxu0 %v1107
    %1131 = vmatprep.subr.mxu0 0.0
    %1132 = vmatpush1.msra.mxu0 %v1106
    %1133 = vmatprep.subr.mxu0 0.0
    %1134 = vmatpush1.msra.mxu0 %v1105
    %1135 = vmatprep.subr.mxu0 0.0
    %1136 = vmatpush1.msra.mxu0 %v1104
    %1137 = vmatprep.subr.mxu0 0.0
    %1138 = vmatpush1.msra.mxu0 %v1103
    %1139 = vmatprep.subr.mxu0 0.0
    %1140 = vmatpush1.msra.mxu0 %v1102
    %1141 = vmatprep.subr.mxu0 0.0
    %1142 = vmatpush1.msra.mxu0 %v1101
    %1143 = vmatprep.subr.mxu0 0.0
    %1144 = vmatpush1.msra.mxu0 %v1100
    %1145 = vmatprep.subr.mxu0 0.0
    %1146 = vmatpush1.msra.mxu0 %v1099
    %1147 = vmatprep.subr.mxu0 0.0
    %1148 = vmatpush2.msra.mxu0 0.0
    %1149 = vmatprep.subr.mxu0 0.0
    %1150 = vmatpush2.msra.mxu0 0.0
    %1151 = vmatprep.subr.mxu0 0.0
    %1152 = vmatpush2.msra.mxu0 0.0
    %1153 = vmatprep.subr.mxu0 0.0
    %1154 = vmatpush2.msra.mxu0 0.0
    %1155 = vmatprep.subr.mxu0 0.0
    %1156 = vmatpush2.msra.mxu0 0.0
    %1157 = vmatprep.subr.mxu0 0.0
    %1158 = vmatpush2.msra.mxu0 0.0
    %1159 = vmatprep.subr.mxu0 0.0
    %1160 = vmatpush2.msra.mxu0 0.0
    %1161 = vmatprep.subr.mxu0 0.0
    %1162 = vmatpush2.msra.mxu0 0.0
    %1163 = vmatprep.subr.mxu0 0.0
    %1164 = vmatpush2.msra.mxu0 0.0
    %1165 = vmatprep.subr.mxu0 0.0
    %1166 = vmatpush2.msra.mxu0 0.0
    %1167 = vmatprep.subr.mxu0 0.0
    %1168 = vmatpush2.msra.mxu0 0.0
    %1169 = vmatprep.subr.mxu0 0.0
    %1170 = vmatpush2.msra.mxu0 0.0
    %1171 = vmatprep.subr.mxu0 0.0
    %1172 = vmatpush2.msra.mxu0 0.0
    %1173 = vmatprep.subr.mxu0 0.0
    %1174 = vmatpush2.msra.mxu0 0.0
    %1175 = vmatprep.subr.mxu0 0.0
    %1176 = vmatpush2.msra.mxu0 0.0
    %1177 = vmatprep.subr.mxu0 0.0
    %1178 = vmatpush2.msra.mxu0 0.0
    %1179 = vmatprep.mubr.f32.mxu0 0.0
    %1180 = vmatmul.mubr.f32.gmra.mxu0 %v1082
    %v1181 = vpop.f32.mrf.mxu0
    %v1182 = vadd.f32 0.0, %v1181
    %v1183 = vpop.f32.mrf.mxu0
    %1184 = vmatprep.mubr.f32.mxu0 0.0
    %1185 = vmatmul.mubr.f32.gmra.mxu0 %v1083
    %v1186 = vpop.f32.mrf.mxu0
    %v1187 = vadd.f32 0.0, %v1186
    %v1188 = vpop.f32.mrf.mxu0
    %1189 = vmatprep.mubr.f32.mxu0 0.0
    %1190 = vmatmul.mubr.f32.gmra.mxu0 %v1084
    %v1191 = vpop.f32.mrf.mxu0
    %v1192 = vadd.f32 0.0, %v1191
    %v1193 = vpop.f32.mrf.mxu0
    %1194 = vmatprep.mubr.f32.mxu0 0.0
    %1195 = vmatmul.mubr.f32.gmra.mxu0 %v1085
    %v1196 = vpop.f32.mrf.mxu0
    %v1197 = vadd.f32 0.0, %v1196
    %v1198 = vpop.f32.mrf.mxu0
    %1199 = vmatprep.mubr.f32.mxu0 0.0
    %1200 = vmatmul.mubr.f32.gmra.mxu0 %v1086
    %v1201 = vpop.f32.mrf.mxu0
    %v1202 = vadd.f32 0.0, %v1201
    %v1203 = vpop.f32.mrf.mxu0
    %1204 = vmatprep.mubr.f32.mxu0 0.0
    %1205 = vmatmul.mubr.f32.gmra.mxu0 %v1087
    %v1206 = vpop.f32.mrf.mxu0
    %v1207 = vadd.f32 0.0, %v1206
    %v1208 = vpop.f32.mrf.mxu0
    %1209 = vmatprep.mubr.f32.mxu0 0.0
    %1210 = vmatmul.mubr.f32.gmra.mxu0 %v1088
    %v1211 = vpop.f32.mrf.mxu0
    %v1212 = vadd.f32 0.0, %v1211
    %v1213 = vpop.f32.mrf.mxu0
    %1214 = vmatprep.mubr.f32.mxu0 0.0
    %1215 = vmatmul.mubr.f32.gmra.mxu0 %v1089
    %v1216 = vpop.f32.mrf.mxu0
    %v1217 = vadd.f32 0.0, %v1216
    %v1218 = vpop.f32.mrf.mxu0
    %1219 = vmatprep.mubr.f32.mxu0 0.0
    %1220 = vmatmul.mubr.f32.gmra.mxu0 %v1090
    %v1221 = vpop.f32.mrf.mxu0
    %v1222 = vadd.f32 0.0, %v1221
    %v1223 = vpop.f32.mrf.mxu0
    %1224 = vmatprep.mubr.f32.mxu0 0.0
    %1225 = vmatmul.mubr.f32.gmra.mxu0 %v1091
    %v1226 = vpop.f32.mrf.mxu0
    %v1227 = vadd.f32 0.0, %v1226
    %v1228 = vpop.f32.mrf.mxu0
    %1229 = vmatprep.mubr.f32.mxu0 0.0
    %1230 = vmatmul.mubr.f32.gmra.mxu0 %v1092
    %v1231 = vpop.f32.mrf.mxu0
    %v1232 = vadd.f32 0.0, %v1231
    %v1233 = vpop.f32.mrf.mxu0
    %1234 = vmatprep.mubr.f32.mxu0 0.0
    %1235 = vmatmul.mubr.f32.gmra.mxu0 %v1093
    %v1236 = vpop.f32.mrf.mxu0
    %v1237 = vadd.f32 0.0, %v1236
    %v1238 = vpop.f32.mrf.mxu0
    %1239 = vmatprep.mubr.f32.mxu0 0.0
    %1240 = vmatmul.mubr.f32.gmra.mxu0 %v1094
    %v1241 = vpop.f32.mrf.mxu0
    %v1242 = vadd.f32 0.0, %v1241
    %v1243 = vpop.f32.mrf.mxu0
    %1244 = vmatprep.mubr.f32.mxu0 0.0
    %1245 = vmatmul.mubr.f32.gmra.mxu0 %v1095
    %v1246 = vpop.f32.mrf.mxu0
    %v1247 = vadd.f32 0.0, %v1246
    %v1248 = vpop.f32.mrf.mxu0
    %1249 = vmatprep.mubr.f32.mxu0 0.0
    %1250 = vmatmul.mubr.f32.gmra.mxu0 %v1096
    %v1251 = vpop.f32.mrf.mxu0
    %v1252 = vadd.f32 0.0, %v1251
    %v1253 = vpop.f32.mrf.mxu0
    %1254 = vmatprep.mubr.f32.mxu0 0.0
    %1255 = vmatmul.mubr.f32.gmra.mxu0 %v1097
    %v1256 = vpop.f32.mrf.mxu0
    %v1257 = vadd.f32 0.0, %v1256
    %v1258 = vpop.f32.mrf.mxu0
    %1259 = vdwg.mxu0
    %v1260 = vadd.f32 %v1066, %v1182
    %v1261 = vadd.f32 %v1067, %v1187
    %v1262 = vadd.f32 %v1068, %v1192
    %v1263 = vadd.f32 %v1069, %v1197
    %v1264 = vadd.f32 %v1070, %v1202
    %v1265 = vadd.f32 %v1071, %v1207
    %v1266 = vadd.f32 %v1072, %v1212
    %v1267 = vadd.f32 %v1073, %v1217
    %v1268 = vadd.f32 %v1074, %v1222
    %v1269 = vadd.f32 %v1075, %v1227
    %v1270 = vadd.f32 %v1076, %v1232
    %v1271 = vadd.f32 %v1077, %v1237
    %v1272 = vadd.f32 %v1078, %v1242
    %v1273 = vadd.f32 %v1079, %v1247
    %v1274 = vadd.f32 %v1080, %v1252
    %v1275 = vadd.f32 %v1081, %v1257
    %s1276 = scalar_lea.vmem [#allocation2], 32
    %v1277 = vld [vmem:[%s1276] sm:$0xff]
    %v1278 = vld [vmem:[%s1276 + $0x10] sm:$0xff]
    %v1279 = vld [vmem:[%s1276 + $0x20] sm:$0xff]
    %v1280 = vld [vmem:[%s1276 + $0x30] sm:$0xff]
    %v1281 = vld [vmem:[%s1276 + $0x40] sm:$0xff]
    %v1282 = vld [vmem:[%s1276 + $0x50] sm:$0xff]
    %v1283 = vld [vmem:[%s1276 + $0x60] sm:$0xff]
    %v1284 = vld [vmem:[%s1276 + $0x70] sm:$0xff]
    %v1285 = vld [vmem:[%s1276 + $0xa0] sm:$0xff]
    %v1286 = vld [vmem:[%s1276 + $0xb0] sm:$0xff]
    %v1287 = vld [vmem:[%s1276 + $0xc0] sm:$0xff]
    %v1288 = vld [vmem:[%s1276 + $0xd0] sm:$0xff]
    %v1289 = vld [vmem:[%s1276 + $0xe0] sm:$0xff]
    %v1290 = vld [vmem:[%s1276 + $0xf0] sm:$0xff]
    %v1291 = vld [vmem:[%s1276 + $0x100] sm:$0xff]
    %v1292 = vld [vmem:[%s1276 + $0x110] sm:$0xff]
    %s1293 = scalar_lea.vmem [#allocation6], 768
    %v1294 = vld [vmem:[%s1293] sm:$0xff]
    %v1295 = vld [vmem:[%s1293 + $0x8] sm:$0xff]
    %v1296 = vld [vmem:[%s1293 + $0x10] sm:$0xff]
    %v1297 = vld [vmem:[%s1293 + $0x18] sm:$0xff]
    %v1298 = vld [vmem:[%s1293 + $0x20] sm:$0xff]
    %v1299 = vld [vmem:[%s1293 + $0x28] sm:$0xff]
    %v1300 = vld [vmem:[%s1293 + $0x30] sm:$0xff]
    %v1301 = vld [vmem:[%s1293 + $0x38] sm:$0xff]
    %v1302 = vld [vmem:[%s1293 + $0x40] sm:$0xff]
    %v1303 = vld [vmem:[%s1293 + $0x48] sm:$0xff]
    %v1304 = vld [vmem:[%s1293 + $0x50] sm:$0xff]
    %v1305 = vld [vmem:[%s1293 + $0x58] sm:$0xff]
    %v1306 = vld [vmem:[%s1293 + $0x60] sm:$0xff]
    %v1307 = vld [vmem:[%s1293 + $0x68] sm:$0xff]
    %v1308 = vld [vmem:[%s1293 + $0x70] sm:$0xff]
    %v1309 = vld [vmem:[%s1293 + $0x78] sm:$0xff]
    %1310 = vmatprep.subr.mxu0 0.0
    %1311 = vmatpush1.msra.mxu0 %v1309
    %1312 = vmatprep.subr.mxu0 0.0
    %1313 = vmatpush1.msra.mxu0 %v1308
    %1314 = vmatprep.subr.mxu0 0.0
    %1315 = vmatpush1.msra.mxu0 %v1307
    %1316 = vmatprep.subr.mxu0 0.0
    %1317 = vmatpush1.msra.mxu0 %v1306
    %1318 = vmatprep.subr.mxu0 0.0
    %1319 = vmatpush1.msra.mxu0 %v1305
    %1320 = vmatprep.subr.mxu0 0.0
    %1321 = vmatpush1.msra.mxu0 %v1304
    %1322 = vmatprep.subr.mxu0 0.0
    %1323 = vmatpush1.msra.mxu0 %v1303
    %1324 = vmatprep.subr.mxu0 0.0
    %1325 = vmatpush1.msra.mxu0 %v1302
    %1326 = vmatprep.subr.mxu0 0.0
    %1327 = vmatpush1.msra.mxu0 %v1301
    %1328 = vmatprep.subr.mxu0 0.0
    %1329 = vmatpush1.msra.mxu0 %v1300
    %1330 = vmatprep.subr.mxu0 0.0
    %1331 = vmatpush1.msra.mxu0 %v1299
    %1332 = vmatprep.subr.mxu0 0.0
    %1333 = vmatpush1.msra.mxu0 %v1298
    %1334 = vmatprep.subr.mxu0 0.0
    %1335 = vmatpush1.msra.mxu0 %v1297
    %1336 = vmatprep.subr.mxu0 0.0
    %1337 = vmatpush1.msra.mxu0 %v1296
    %1338 = vmatprep.subr.mxu0 0.0
    %1339 = vmatpush1.msra.mxu0 %v1295
    %1340 = vmatprep.subr.mxu0 0.0
    %1341 = vmatpush1.msra.mxu0 %v1294
    %1342 = vmatprep.subr.mxu0 0.0
    %1343 = vmatpush2.msra.mxu0 0.0
    %1344 = vmatprep.subr.mxu0 0.0
    %1345 = vmatpush2.msra.mxu0 0.0
    %1346 = vmatprep.subr.mxu0 0.0
    %1347 = vmatpush2.msra.mxu0 0.0
    %1348 = vmatprep.subr.mxu0 0.0
    %1349 = vmatpush2.msra.mxu0 0.0
    %1350 = vmatprep.subr.mxu0 0.0
    %1351 = vmatpush2.msra.mxu0 0.0
    %1352 = vmatprep.subr.mxu0 0.0
    %1353 = vmatpush2.msra.mxu0 0.0
    %1354 = vmatprep.subr.mxu0 0.0
    %1355 = vmatpush2.msra.mxu0 0.0
    %1356 = vmatprep.subr.mxu0 0.0
    %1357 = vmatpush2.msra.mxu0 0.0
    %1358 = vmatprep.subr.mxu0 0.0
    %1359 = vmatpush2.msra.mxu0 0.0
    %1360 = vmatprep.subr.mxu0 0.0
    %1361 = vmatpush2.msra.mxu0 0.0
    %1362 = vmatprep.subr.mxu0 0.0
    %1363 = vmatpush2.msra.mxu0 0.0
    %1364 = vmatprep.subr.mxu0 0.0
    %1365 = vmatpush2.msra.mxu0 0.0
    %1366 = vmatprep.subr.mxu0 0.0
    %1367 = vmatpush2.msra.mxu0 0.0
    %1368 = vmatprep.subr.mxu0 0.0
    %1369 = vmatpush2.msra.mxu0 0.0
    %1370 = vmatprep.subr.mxu0 0.0
    %1371 = vmatpush2.msra.mxu0 0.0
    %1372 = vmatprep.subr.mxu0 0.0
    %1373 = vmatpush2.msra.mxu0 0.0
    %1374 = vmatprep.mubr.f32.mxu0 0.0
    %1375 = vmatmul.mubr.f32.gmra.mxu0 %v1277
    %v1376 = vpop.f32.mrf.mxu0
    %v1377 = vadd.f32 0.0, %v1376
    %v1378 = vpop.f32.mrf.mxu0
    %1379 = vmatprep.mubr.f32.mxu0 0.0
    %1380 = vmatmul.mubr.f32.gmra.mxu0 %v1278
    %v1381 = vpop.f32.mrf.mxu0
    %v1382 = vadd.f32 0.0, %v1381
    %v1383 = vpop.f32.mrf.mxu0
    %1384 = vmatprep.mubr.f32.mxu0 0.0
    %1385 = vmatmul.mubr.f32.gmra.mxu0 %v1279
    %v1386 = vpop.f32.mrf.mxu0
    %v1387 = vadd.f32 0.0, %v1386
    %v1388 = vpop.f32.mrf.mxu0
    %1389 = vmatprep.mubr.f32.mxu0 0.0
    %1390 = vmatmul.mubr.f32.gmra.mxu0 %v1280
    %v1391 = vpop.f32.mrf.mxu0
    %v1392 = vadd.f32 0.0, %v1391
    %v1393 = vpop.f32.mrf.mxu0
    %1394 = vmatprep.mubr.f32.mxu0 0.0
    %1395 = vmatmul.mubr.f32.gmra.mxu0 %v1281
    %v1396 = vpop.f32.mrf.mxu0
    %v1397 = vadd.f32 0.0, %v1396
    %v1398 = vpop.f32.mrf.mxu0
    %1399 = vmatprep.mubr.f32.mxu0 0.0
    %1400 = vmatmul.mubr.f32.gmra.mxu0 %v1282
    %v1401 = vpop.f32.mrf.mxu0
    %v1402 = vadd.f32 0.0, %v1401
    %v1403 = vpop.f32.mrf.mxu0
    %1404 = vmatprep.mubr.f32.mxu0 0.0
    %1405 = vmatmul.mubr.f32.gmra.mxu0 %v1283
    %v1406 = vpop.f32.mrf.mxu0
    %v1407 = vadd.f32 0.0, %v1406
    %v1408 = vpop.f32.mrf.mxu0
    %1409 = vmatprep.mubr.f32.mxu0 0.0
    %1410 = vmatmul.mubr.f32.gmra.mxu0 %v1284
    %v1411 = vpop.f32.mrf.mxu0
    %v1412 = vadd.f32 0.0, %v1411
    %v1413 = vpop.f32.mrf.mxu0
    %1414 = vmatprep.mubr.f32.mxu0 0.0
    %1415 = vmatmul.mubr.f32.gmra.mxu0 %v1285
    %v1416 = vpop.f32.mrf.mxu0
    %v1417 = vadd.f32 0.0, %v1416
    %v1418 = vpop.f32.mrf.mxu0
    %1419 = vmatprep.mubr.f32.mxu0 0.0
    %1420 = vmatmul.mubr.f32.gmra.mxu0 %v1286
    %v1421 = vpop.f32.mrf.mxu0
    %v1422 = vadd.f32 0.0, %v1421
    %v1423 = vpop.f32.mrf.mxu0
    %1424 = vmatprep.mubr.f32.mxu0 0.0
    %1425 = vmatmul.mubr.f32.gmra.mxu0 %v1287
    %v1426 = vpop.f32.mrf.mxu0
    %v1427 = vadd.f32 0.0, %v1426
    %v1428 = vpop.f32.mrf.mxu0
    %1429 = vmatprep.mubr.f32.mxu0 0.0
    %1430 = vmatmul.mubr.f32.gmra.mxu0 %v1288
    %v1431 = vpop.f32.mrf.mxu0
    %v1432 = vadd.f32 0.0, %v1431
    %v1433 = vpop.f32.mrf.mxu0
    %1434 = vmatprep.mubr.f32.mxu0 0.0
    %1435 = vmatmul.mubr.f32.gmra.mxu0 %v1289
    %v1436 = vpop.f32.mrf.mxu0
    %v1437 = vadd.f32 0.0, %v1436
    %v1438 = vpop.f32.mrf.mxu0
    %1439 = vmatprep.mubr.f32.mxu0 0.0
    %1440 = vmatmul.mubr.f32.gmra.mxu0 %v1290
    %v1441 = vpop.f32.mrf.mxu0
    %v1442 = vadd.f32 0.0, %v1441
    %v1443 = vpop.f32.mrf.mxu0
    %1444 = vmatprep.mubr.f32.mxu0 0.0
    %1445 = vmatmul.mubr.f32.gmra.mxu0 %v1291
    %v1446 = vpop.f32.mrf.mxu0
    %v1447 = vadd.f32 0.0, %v1446
    %v1448 = vpop.f32.mrf.mxu0
    %1449 = vmatprep.mubr.f32.mxu0 0.0
    %1450 = vmatmul.mubr.f32.gmra.mxu0 %v1292
    %v1451 = vpop.f32.mrf.mxu0
    %v1452 = vadd.f32 0.0, %v1451
    %v1453 = vpop.f32.mrf.mxu0
    %1454 = vdwg.mxu0
    %v1455 = vadd.f32 %v1260, %v1377
    %v1456 = vadd.f32 %v1261, %v1382
    %v1457 = vadd.f32 %v1262, %v1387
    %v1458 = vadd.f32 %v1263, %v1392
    %v1459 = vadd.f32 %v1264, %v1397
    %v1460 = vadd.f32 %v1265, %v1402
    %v1461 = vadd.f32 %v1266, %v1407
    %v1462 = vadd.f32 %v1267, %v1412
    %v1463 = vadd.f32 %v1268, %v1417
    %v1464 = vadd.f32 %v1269, %v1422
    %v1465 = vadd.f32 %v1270, %v1427
    %v1466 = vadd.f32 %v1271, %v1432
    %v1467 = vadd.f32 %v1272, %v1437
    %v1468 = vadd.f32 %v1273, %v1442
    %v1469 = vadd.f32 %v1274, %v1447
    %v1470 = vadd.f32 %v1275, %v1452
    %v1471 = vld [vmem:[%s1276 + $0x1] sm:$0xff]
    %v1472 = vld [vmem:[%s1276 + $0x11] sm:$0xff]
    %v1473 = vld [vmem:[%s1276 + $0x21] sm:$0xff]
    %v1474 = vld [vmem:[%s1276 + $0x31] sm:$0xff]
    %v1475 = vld [vmem:[%s1276 + $0x41] sm:$0xff]
    %v1476 = vld [vmem:[%s1276 + $0x51] sm:$0xff]
    %v1477 = vld [vmem:[%s1276 + $0x61] sm:$0xff]
    %v1478 = vld [vmem:[%s1276 + $0x71] sm:$0xff]
    %v1479 = vld [vmem:[%s1276 + $0xa1] sm:$0xff]
    %v1480 = vld [vmem:[%s1276 + $0xb1] sm:$0xff]
    %v1481 = vld [vmem:[%s1276 + $0xc1] sm:$0xff]
    %v1482 = vld [vmem:[%s1276 + $0xd1] sm:$0xff]
    %v1483 = vld [vmem:[%s1276 + $0xe1] sm:$0xff]
    %v1484 = vld [vmem:[%s1276 + $0xf1] sm:$0xff]
    %v1485 = vld [vmem:[%s1276 + $0x101] sm:$0xff]
    %v1486 = vld [vmem:[%s1276 + $0x111] sm:$0xff]
    %s1487 = scalar_lea.vmem [#allocation6], 896
    %v1488 = vld [vmem:[%s1487] sm:$0xff]
    %v1489 = vld [vmem:[%s1487 + $0x8] sm:$0xff]
    %v1490 = vld [vmem:[%s1487 + $0x10] sm:$0xff]
    %v1491 = vld [vmem:[%s1487 + $0x18] sm:$0xff]
    %v1492 = vld [vmem:[%s1487 + $0x20] sm:$0xff]
    %v1493 = vld [vmem:[%s1487 + $0x28] sm:$0xff]
    %v1494 = vld [vmem:[%s1487 + $0x30] sm:$0xff]
    %v1495 = vld [vmem:[%s1487 + $0x38] sm:$0xff]
    %v1496 = vld [vmem:[%s1487 + $0x40] sm:$0xff]
    %v1497 = vld [vmem:[%s1487 + $0x48] sm:$0xff]
    %v1498 = vld [vmem:[%s1487 + $0x50] sm:$0xff]
    %v1499 = vld [vmem:[%s1487 + $0x58] sm:$0xff]
    %v1500 = vld [vmem:[%s1487 + $0x60] sm:$0xff]
    %v1501 = vld [vmem:[%s1487 + $0x68] sm:$0xff]
    %v1502 = vld [vmem:[%s1487 + $0x70] sm:$0xff]
    %v1503 = vld [vmem:[%s1487 + $0x78] sm:$0xff]
    %1504 = vmatprep.subr.mxu0 0.0
    %1505 = vmatpush1.msra.mxu0 %v1503
    %1506 = vmatprep.subr.mxu0 0.0
    %1507 = vmatpush1.msra.mxu0 %v1502
    %1508 = vmatprep.subr.mxu0 0.0
    %1509 = vmatpush1.msra.mxu0 %v1501
    %1510 = vmatprep.subr.mxu0 0.0
    %1511 = vmatpush1.msra.mxu0 %v1500
    %1512 = vmatprep.subr.mxu0 0.0
    %1513 = vmatpush1.msra.mxu0 %v1499
    %1514 = vmatprep.subr.mxu0 0.0
    %1515 = vmatpush1.msra.mxu0 %v1498
    %1516 = vmatprep.subr.mxu0 0.0
    %1517 = vmatpush1.msra.mxu0 %v1497
    %1518 = vmatprep.subr.mxu0 0.0
    %1519 = vmatpush1.msra.mxu0 %v1496
    %1520 = vmatprep.subr.mxu0 0.0
    %1521 = vmatpush1.msra.mxu0 %v1495
    %1522 = vmatprep.subr.mxu0 0.0
    %1523 = vmatpush1.msra.mxu0 %v1494
    %1524 = vmatprep.subr.mxu0 0.0
    %1525 = vmatpush1.msra.mxu0 %v1493
    %1526 = vmatprep.subr.mxu0 0.0
    %1527 = vmatpush1.msra.mxu0 %v1492
    %1528 = vmatprep.subr.mxu0 0.0
    %1529 = vmatpush1.msra.mxu0 %v1491
    %1530 = vmatprep.subr.mxu0 0.0
    %1531 = vmatpush1.msra.mxu0 %v1490
    %1532 = vmatprep.subr.mxu0 0.0
    %1533 = vmatpush1.msra.mxu0 %v1489
    %1534 = vmatprep.subr.mxu0 0.0
    %1535 = vmatpush1.msra.mxu0 %v1488
    %1536 = vmatprep.subr.mxu0 0.0
    %1537 = vmatpush2.msra.mxu0 0.0
    %1538 = vmatprep.subr.mxu0 0.0
    %1539 = vmatpush2.msra.mxu0 0.0
    %1540 = vmatprep.subr.mxu0 0.0
    %1541 = vmatpush2.msra.mxu0 0.0
    %1542 = vmatprep.subr.mxu0 0.0
    %1543 = vmatpush2.msra.mxu0 0.0
    %1544 = vmatprep.subr.mxu0 0.0
    %1545 = vmatpush2.msra.mxu0 0.0
    %1546 = vmatprep.subr.mxu0 0.0
    %1547 = vmatpush2.msra.mxu0 0.0
    %1548 = vmatprep.subr.mxu0 0.0
    %1549 = vmatpush2.msra.mxu0 0.0
    %1550 = vmatprep.subr.mxu0 0.0
    %1551 = vmatpush2.msra.mxu0 0.0
    %1552 = vmatprep.subr.mxu0 0.0
    %1553 = vmatpush2.msra.mxu0 0.0
    %1554 = vmatprep.subr.mxu0 0.0
    %1555 = vmatpush2.msra.mxu0 0.0
    %1556 = vmatprep.subr.mxu0 0.0
    %1557 = vmatpush2.msra.mxu0 0.0
    %1558 = vmatprep.subr.mxu0 0.0
    %1559 = vmatpush2.msra.mxu0 0.0
    %1560 = vmatprep.subr.mxu0 0.0
    %1561 = vmatpush2.msra.mxu0 0.0
    %1562 = vmatprep.subr.mxu0 0.0
    %1563 = vmatpush2.msra.mxu0 0.0
    %1564 = vmatprep.subr.mxu0 0.0
    %1565 = vmatpush2.msra.mxu0 0.0
    %1566 = vmatprep.subr.mxu0 0.0
    %1567 = vmatpush2.msra.mxu0 0.0
    %1568 = vmatprep.mubr.f32.mxu0 0.0
    %1569 = vmatmul.mubr.f32.gmra.mxu0 %v1471
    %v1570 = vpop.f32.mrf.mxu0
    %v1571 = vadd.f32 0.0, %v1570
    %v1572 = vpop.f32.mrf.mxu0
    %1573 = vmatprep.mubr.f32.mxu0 0.0
    %1574 = vmatmul.mubr.f32.gmra.mxu0 %v1472
    %v1575 = vpop.f32.mrf.mxu0
    %v1576 = vadd.f32 0.0, %v1575
    %v1577 = vpop.f32.mrf.mxu0
    %1578 = vmatprep.mubr.f32.mxu0 0.0
    %1579 = vmatmul.mubr.f32.gmra.mxu0 %v1473
    %v1580 = vpop.f32.mrf.mxu0
    %v1581 = vadd.f32 0.0, %v1580
    %v1582 = vpop.f32.mrf.mxu0
    %1583 = vmatprep.mubr.f32.mxu0 0.0
    %1584 = vmatmul.mubr.f32.gmra.mxu0 %v1474
    %v1585 = vpop.f32.mrf.mxu0
    %v1586 = vadd.f32 0.0, %v1585
    %v1587 = vpop.f32.mrf.mxu0
    %1588 = vmatprep.mubr.f32.mxu0 0.0
    %1589 = vmatmul.mubr.f32.gmra.mxu0 %v1475
    %v1590 = vpop.f32.mrf.mxu0
    %v1591 = vadd.f32 0.0, %v1590
    %v1592 = vpop.f32.mrf.mxu0
    %1593 = vmatprep.mubr.f32.mxu0 0.0
    %1594 = vmatmul.mubr.f32.gmra.mxu0 %v1476
    %v1595 = vpop.f32.mrf.mxu0
    %v1596 = vadd.f32 0.0, %v1595
    %v1597 = vpop.f32.mrf.mxu0
    %1598 = vmatprep.mubr.f32.mxu0 0.0
    %1599 = vmatmul.mubr.f32.gmra.mxu0 %v1477
    %v1600 = vpop.f32.mrf.mxu0
    %v1601 = vadd.f32 0.0, %v1600
    %v1602 = vpop.f32.mrf.mxu0
    %1603 = vmatprep.mubr.f32.mxu0 0.0
    %1604 = vmatmul.mubr.f32.gmra.mxu0 %v1478
    %v1605 = vpop.f32.mrf.mxu0
    %v1606 = vadd.f32 0.0, %v1605
    %v1607 = vpop.f32.mrf.mxu0
    %1608 = vmatprep.mubr.f32.mxu0 0.0
    %1609 = vmatmul.mubr.f32.gmra.mxu0 %v1479
    %v1610 = vpop.f32.mrf.mxu0
    %v1611 = vadd.f32 0.0, %v1610
    %v1612 = vpop.f32.mrf.mxu0
    %1613 = vmatprep.mubr.f32.mxu0 0.0
    %1614 = vmatmul.mubr.f32.gmra.mxu0 %v1480
    %v1615 = vpop.f32.mrf.mxu0
    %v1616 = vadd.f32 0.0, %v1615
    %v1617 = vpop.f32.mrf.mxu0
    %1618 = vmatprep.mubr.f32.mxu0 0.0
    %1619 = vmatmul.mubr.f32.gmra.mxu0 %v1481
    %v1620 = vpop.f32.mrf.mxu0
    %v1621 = vadd.f32 0.0, %v1620
    %v1622 = vpop.f32.mrf.mxu0
    %1623 = vmatprep.mubr.f32.mxu0 0.0
    %1624 = vmatmul.mubr.f32.gmra.mxu0 %v1482
    %v1625 = vpop.f32.mrf.mxu0
    %v1626 = vadd.f32 0.0, %v1625
    %v1627 = vpop.f32.mrf.mxu0
    %1628 = vmatprep.mubr.f32.mxu0 0.0
    %1629 = vmatmul.mubr.f32.gmra.mxu0 %v1483
    %v1630 = vpop.f32.mrf.mxu0
    %v1631 = vadd.f32 0.0, %v1630
    %v1632 = vpop.f32.mrf.mxu0
    %1633 = vmatprep.mubr.f32.mxu0 0.0
    %1634 = vmatmul.mubr.f32.gmra.mxu0 %v1484
    %v1635 = vpop.f32.mrf.mxu0
    %v1636 = vadd.f32 0.0, %v1635
    %v1637 = vpop.f32.mrf.mxu0
    %1638 = vmatprep.mubr.f32.mxu0 0.0
    %1639 = vmatmul.mubr.f32.gmra.mxu0 %v1485
    %v1640 = vpop.f32.mrf.mxu0
    %v1641 = vadd.f32 0.0, %v1640
    %v1642 = vpop.f32.mrf.mxu0
    %1643 = vmatprep.mubr.f32.mxu0 0.0
    %1644 = vmatmul.mubr.f32.gmra.mxu0 %v1486
    %v1645 = vpop.f32.mrf.mxu0
    %v1646 = vadd.f32 0.0, %v1645
    %v1647 = vpop.f32.mrf.mxu0
    %1648 = vdwg.mxu0
    %v1649 = vadd.f32 %v1455, %v1571
    %v1650 = vadd.f32 %v1456, %v1576
    %v1651 = vadd.f32 %v1457, %v1581
    %v1652 = vadd.f32 %v1458, %v1586
    %v1653 = vadd.f32 %v1459, %v1591
    %v1654 = vadd.f32 %v1460, %v1596
    %v1655 = vadd.f32 %v1461, %v1601
    %v1656 = vadd.f32 %v1462, %v1606
    %v1657 = vadd.f32 %v1463, %v1611
    %v1658 = vadd.f32 %v1464, %v1616
    %v1659 = vadd.f32 %v1465, %v1621
    %v1660 = vadd.f32 %v1466, %v1626
    %v1661 = vadd.f32 %v1467, %v1631
    %v1662 = vadd.f32 %v1468, %v1636
    %v1663 = vadd.f32 %v1469, %v1641
    %v1664 = vadd.f32 %v1470, %v1646
    %v1665 = vld [vmem:[%s1276 + $0x2] sm:$0xff]
    %v1666 = vld [vmem:[%s1276 + $0x12] sm:$0xff]
    %v1667 = vld [vmem:[%s1276 + $0x22] sm:$0xff]
    %v1668 = vld [vmem:[%s1276 + $0x32] sm:$0xff]
    %v1669 = vld [vmem:[%s1276 + $0x42] sm:$0xff]
    %v1670 = vld [vmem:[%s1276 + $0x52] sm:$0xff]
    %v1671 = vld [vmem:[%s1276 + $0x62] sm:$0xff]
    %v1672 = vld [vmem:[%s1276 + $0x72] sm:$0xff]
    %v1673 = vld [vmem:[%s1276 + $0xa2] sm:$0xff]
    %v1674 = vld [vmem:[%s1276 + $0xb2] sm:$0xff]
    %v1675 = vld [vmem:[%s1276 + $0xc2] sm:$0xff]
    %v1676 = vld [vmem:[%s1276 + $0xd2] sm:$0xff]
    %v1677 = vld [vmem:[%s1276 + $0xe2] sm:$0xff]
    %v1678 = vld [vmem:[%s1276 + $0xf2] sm:$0xff]
    %v1679 = vld [vmem:[%s1276 + $0x102] sm:$0xff]
    %v1680 = vld [vmem:[%s1276 + $0x112] sm:$0xff]
    %s1681 = scalar_lea.vmem [#allocation6], 1024
    %v1682 = vld [vmem:[%s1681] sm:$0xff]
    %v1683 = vld [vmem:[%s1681 + $0x8] sm:$0xff]
    %v1684 = vld [vmem:[%s1681 + $0x10] sm:$0xff]
    %v1685 = vld [vmem:[%s1681 + $0x18] sm:$0xff]
    %v1686 = vld [vmem:[%s1681 + $0x20] sm:$0xff]
    %v1687 = vld [vmem:[%s1681 + $0x28] sm:$0xff]
    %v1688 = vld [vmem:[%s1681 + $0x30] sm:$0xff]
    %v1689 = vld [vmem:[%s1681 + $0x38] sm:$0xff]
    %v1690 = vld [vmem:[%s1681 + $0x40] sm:$0xff]
    %v1691 = vld [vmem:[%s1681 + $0x48] sm:$0xff]
    %v1692 = vld [vmem:[%s1681 + $0x50] sm:$0xff]
    %v1693 = vld [vmem:[%s1681 + $0x58] sm:$0xff]
    %v1694 = vld [vmem:[%s1681 + $0x60] sm:$0xff]
    %v1695 = vld [vmem:[%s1681 + $0x68] sm:$0xff]
    %v1696 = vld [vmem:[%s1681 + $0x70] sm:$0xff]
    %v1697 = vld [vmem:[%s1681 + $0x78] sm:$0xff]
    %1698 = vmatprep.subr.mxu0 0.0
    %1699 = vmatpush1.msra.mxu0 %v1697
    %1700 = vmatprep.subr.mxu0 0.0
    %1701 = vmatpush1.msra.mxu0 %v1696
    %1702 = vmatprep.subr.mxu0 0.0
    %1703 = vmatpush1.msra.mxu0 %v1695
    %1704 = vmatprep.subr.mxu0 0.0
    %1705 = vmatpush1.msra.mxu0 %v1694
    %1706 = vmatprep.subr.mxu0 0.0
    %1707 = vmatpush1.msra.mxu0 %v1693
    %1708 = vmatprep.subr.mxu0 0.0
    %1709 = vmatpush1.msra.mxu0 %v1692
    %1710 = vmatprep.subr.mxu0 0.0
    %1711 = vmatpush1.msra.mxu0 %v1691
    %1712 = vmatprep.subr.mxu0 0.0
    %1713 = vmatpush1.msra.mxu0 %v1690
    %1714 = vmatprep.subr.mxu0 0.0
    %1715 = vmatpush1.msra.mxu0 %v1689
    %1716 = vmatprep.subr.mxu0 0.0
    %1717 = vmatpush1.msra.mxu0 %v1688
    %1718 = vmatprep.subr.mxu0 0.0
    %1719 = vmatpush1.msra.mxu0 %v1687
    %1720 = vmatprep.subr.mxu0 0.0
    %1721 = vmatpush1.msra.mxu0 %v1686
    %1722 = vmatprep.subr.mxu0 0.0
    %1723 = vmatpush1.msra.mxu0 %v1685
    %1724 = vmatprep.subr.mxu0 0.0
    %1725 = vmatpush1.msra.mxu0 %v1684
    %1726 = vmatprep.subr.mxu0 0.0
    %1727 = vmatpush1.msra.mxu0 %v1683
    %1728 = vmatprep.subr.mxu0 0.0
    %1729 = vmatpush1.msra.mxu0 %v1682
    %1730 = vmatprep.subr.mxu0 0.0
    %1731 = vmatpush2.msra.mxu0 0.0
    %1732 = vmatprep.subr.mxu0 0.0
    %1733 = vmatpush2.msra.mxu0 0.0
    %1734 = vmatprep.subr.mxu0 0.0
    %1735 = vmatpush2.msra.mxu0 0.0
    %1736 = vmatprep.subr.mxu0 0.0
    %1737 = vmatpush2.msra.mxu0 0.0
    %1738 = vmatprep.subr.mxu0 0.0
    %1739 = vmatpush2.msra.mxu0 0.0
    %1740 = vmatprep.subr.mxu0 0.0
    %1741 = vmatpush2.msra.mxu0 0.0
    %1742 = vmatprep.subr.mxu0 0.0
    %1743 = vmatpush2.msra.mxu0 0.0
    %1744 = vmatprep.subr.mxu0 0.0
    %1745 = vmatpush2.msra.mxu0 0.0
    %1746 = vmatprep.subr.mxu0 0.0
    %1747 = vmatpush2.msra.mxu0 0.0
    %1748 = vmatprep.subr.mxu0 0.0
    %1749 = vmatpush2.msra.mxu0 0.0
    %1750 = vmatprep.subr.mxu0 0.0
    %1751 = vmatpush2.msra.mxu0 0.0
    %1752 = vmatprep.subr.mxu0 0.0
    %1753 = vmatpush2.msra.mxu0 0.0
    %1754 = vmatprep.subr.mxu0 0.0
    %1755 = vmatpush2.msra.mxu0 0.0
    %1756 = vmatprep.subr.mxu0 0.0
    %1757 = vmatpush2.msra.mxu0 0.0
    %1758 = vmatprep.subr.mxu0 0.0
    %1759 = vmatpush2.msra.mxu0 0.0
    %1760 = vmatprep.subr.mxu0 0.0
    %1761 = vmatpush2.msra.mxu0 0.0
    %1762 = vmatprep.mubr.f32.mxu0 0.0
    %1763 = vmatmul.mubr.f32.gmra.mxu0 %v1665
    %v1764 = vpop.f32.mrf.mxu0
    %v1765 = vadd.f32 0.0, %v1764
    %v1766 = vpop.f32.mrf.mxu0
    %1767 = vmatprep.mubr.f32.mxu0 0.0
    %1768 = vmatmul.mubr.f32.gmra.mxu0 %v1666
    %v1769 = vpop.f32.mrf.mxu0
    %v1770 = vadd.f32 0.0, %v1769
    %v1771 = vpop.f32.mrf.mxu0
    %1772 = vmatprep.mubr.f32.mxu0 0.0
    %1773 = vmatmul.mubr.f32.gmra.mxu0 %v1667
    %v1774 = vpop.f32.mrf.mxu0
    %v1775 = vadd.f32 0.0, %v1774
    %v1776 = vpop.f32.mrf.mxu0
    %1777 = vmatprep.mubr.f32.mxu0 0.0
    %1778 = vmatmul.mubr.f32.gmra.mxu0 %v1668
    %v1779 = vpop.f32.mrf.mxu0
    %v1780 = vadd.f32 0.0, %v1779
    %v1781 = vpop.f32.mrf.mxu0
    %1782 = vmatprep.mubr.f32.mxu0 0.0
    %1783 = vmatmul.mubr.f32.gmra.mxu0 %v1669
    %v1784 = vpop.f32.mrf.mxu0
    %v1785 = vadd.f32 0.0, %v1784
    %v1786 = vpop.f32.mrf.mxu0
    %1787 = vmatprep.mubr.f32.mxu0 0.0
    %1788 = vmatmul.mubr.f32.gmra.mxu0 %v1670
    %v1789 = vpop.f32.mrf.mxu0
    %v1790 = vadd.f32 0.0, %v1789
    %v1791 = vpop.f32.mrf.mxu0
    %1792 = vmatprep.mubr.f32.mxu0 0.0
    %1793 = vmatmul.mubr.f32.gmra.mxu0 %v1671
    %v1794 = vpop.f32.mrf.mxu0
    %v1795 = vadd.f32 0.0, %v1794
    %v1796 = vpop.f32.mrf.mxu0
    %1797 = vmatprep.mubr.f32.mxu0 0.0
    %1798 = vmatmul.mubr.f32.gmra.mxu0 %v1672
    %v1799 = vpop.f32.mrf.mxu0
    %v1800 = vadd.f32 0.0, %v1799
    %v1801 = vpop.f32.mrf.mxu0
    %1802 = vmatprep.mubr.f32.mxu0 0.0
    %1803 = vmatmul.mubr.f32.gmra.mxu0 %v1673
    %v1804 = vpop.f32.mrf.mxu0
    %v1805 = vadd.f32 0.0, %v1804
    %v1806 = vpop.f32.mrf.mxu0
    %1807 = vmatprep.mubr.f32.mxu0 0.0
    %1808 = vmatmul.mubr.f32.gmra.mxu0 %v1674
    %v1809 = vpop.f32.mrf.mxu0
    %v1810 = vadd.f32 0.0, %v1809
    %v1811 = vpop.f32.mrf.mxu0
    %1812 = vmatprep.mubr.f32.mxu0 0.0
    %1813 = vmatmul.mubr.f32.gmra.mxu0 %v1675
    %v1814 = vpop.f32.mrf.mxu0
    %v1815 = vadd.f32 0.0, %v1814
    %v1816 = vpop.f32.mrf.mxu0
    %1817 = vmatprep.mubr.f32.mxu0 0.0
    %1818 = vmatmul.mubr.f32.gmra.mxu0 %v1676
    %v1819 = vpop.f32.mrf.mxu0
    %v1820 = vadd.f32 0.0, %v1819
    %v1821 = vpop.f32.mrf.mxu0
    %1822 = vmatprep.mubr.f32.mxu0 0.0
    %1823 = vmatmul.mubr.f32.gmra.mxu0 %v1677
    %v1824 = vpop.f32.mrf.mxu0
    %v1825 = vadd.f32 0.0, %v1824
    %v1826 = vpop.f32.mrf.mxu0
    %1827 = vmatprep.mubr.f32.mxu0 0.0
    %1828 = vmatmul.mubr.f32.gmra.mxu0 %v1678
    %v1829 = vpop.f32.mrf.mxu0
    %v1830 = vadd.f32 0.0, %v1829
    %v1831 = vpop.f32.mrf.mxu0
    %1832 = vmatprep.mubr.f32.mxu0 0.0
    %1833 = vmatmul.mubr.f32.gmra.mxu0 %v1679
    %v1834 = vpop.f32.mrf.mxu0
    %v1835 = vadd.f32 0.0, %v1834
    %v1836 = vpop.f32.mrf.mxu0
    %1837 = vmatprep.mubr.f32.mxu0 0.0
    %1838 = vmatmul.mubr.f32.gmra.mxu0 %v1680
    %v1839 = vpop.f32.mrf.mxu0
    %v1840 = vadd.f32 0.0, %v1839
    %v1841 = vpop.f32.mrf.mxu0
    %1842 = vdwg.mxu0
    %v1843 = vadd.f32 %v1649, %v1765
    %v1844 = vadd.f32 %v1650, %v1770
    %v1845 = vadd.f32 %v1651, %v1775
    %v1846 = vadd.f32 %v1652, %v1780
    %v1847 = vadd.f32 %v1653, %v1785
    %v1848 = vadd.f32 %v1654, %v1790
    %v1849 = vadd.f32 %v1655, %v1795
    %v1850 = vadd.f32 %v1656, %v1800
    %v1851 = vadd.f32 %v1657, %v1805
    %v1852 = vadd.f32 %v1658, %v1810
    %v1853 = vadd.f32 %v1659, %v1815
    %v1854 = vadd.f32 %v1660, %v1820
    %v1855 = vadd.f32 %v1661, %v1825
    %v1856 = vadd.f32 %v1662, %v1830
    %v1857 = vadd.f32 %v1663, %v1835
    %v1858 = vadd.f32 %v1664, %v1840
    %v1859 = vmax.f32 %v1843, 0.0
    %v1860 = vmax.f32 %v1844, 0.0
    %v1861 = vmax.f32 %v1845, 0.0
    %v1862 = vmax.f32 %v1846, 0.0
    %v1863 = vmax.f32 %v1847, 0.0
    %v1864 = vmax.f32 %v1848, 0.0
    %v1865 = vmax.f32 %v1849, 0.0
    %v1866 = vmax.f32 %v1850, 0.0
    %v1867 = vmax.f32 %v1851, 0.0
    %v1868 = vmax.f32 %v1852, 0.0
    %v1869 = vmax.f32 %v1853, 0.0
    %v1870 = vmax.f32 %v1854, 0.0
    %v1871 = vmax.f32 %v1855, 0.0
    %v1872 = vmax.f32 %v1856, 0.0
    %v1873 = vmax.f32 %v1857, 0.0
    %v1874 = vmax.f32 %v1858, 0.0
    %v1875 = vld [vmem:[#allocation8] sm:$0xff]
    %v1876 = vld [vmem:[#allocation8 + $0x8] sm:$0xff]
    %v1877 = vld [vmem:[#allocation8 + $0x10] sm:$0xff]
    %v1878 = vld [vmem:[#allocation8 + $0x18] sm:$0xff]
    %v1879 = vld [vmem:[#allocation8 + $0x20] sm:$0xff]
    %v1880 = vld [vmem:[#allocation8 + $0x28] sm:$0xff]
    %v1881 = vld [vmem:[#allocation8 + $0x30] sm:$0xff]
    %v1882 = vld [vmem:[#allocation8 + $0x38] sm:$0xff]
    %vm1883 = vcmask 523264
    %v1885 = vsel %vm1883, %v1859, 0
    %v1888 = vsel %vm1883, %v1860, 0
    %v1891 = vsel %vm1883, %v1861, 0
    %v1894 = vsel %vm1883, %v1862, 0
    %v1897 = vsel %vm1883, %v1863, 0
    %v1900 = vsel %vm1883, %v1864, 0
    %v1903 = vsel %vm1883, %v1865, 0
    %v1906 = vsel %vm1883, %v1866, 0
    %v1909 = vsel %vm1883, %v1867, 0
    %v1912 = vsel %vm1883, %v1868, 0
    %v1915 = vsel %vm1883, %v1869, 0
    %v1918 = vsel %vm1883, %v1870, 0
    %v1921 = vsel %vm1883, %v1871, 0
    %v1924 = vsel %vm1883, %v1872, 0
    %v1927 = vsel %vm1883, %v1873, 0
    %v1930 = vsel %vm1883, %v1874, 0
    %1932 = vmatprep.subr.mxu0 0.0
    %1933 = vmatpush1.msra.mxu0 0.0
    %1934 = vmatprep.subr.mxu0 0.0
    %1935 = vmatpush1.msra.mxu0 0.0
    %1936 = vmatprep.subr.mxu0 0.0
    %1937 = vmatpush1.msra.mxu0 0.0
    %1938 = vmatprep.subr.mxu0 0.0
    %1939 = vmatpush1.msra.mxu0 0.0
    %1940 = vmatprep.subr.mxu0 0.0
    %1941 = vmatpush1.msra.mxu0 0.0
    %1942 = vmatprep.subr.mxu0 0.0
    %1943 = vmatpush1.msra.mxu0 0.0
    %1944 = vmatprep.subr.mxu0 0.0
    %1945 = vmatpush1.msra.mxu0 0.0
    %1946 = vmatprep.subr.mxu0 0.0
    %1947 = vmatpush1.msra.mxu0 0.0
    %1948 = vmatprep.subr.mxu0 0.0
    %1949 = vmatpush1.msra.mxu0 %v1882
    %1950 = vmatprep.subr.mxu0 0.0
    %1951 = vmatpush1.msra.mxu0 %v1881
    %1952 = vmatprep.subr.mxu0 0.0
    %1953 = vmatpush1.msra.mxu0 %v1880
    %1954 = vmatprep.subr.mxu0 0.0
    %1955 = vmatpush1.msra.mxu0 %v1879
    %1956 = vmatprep.subr.mxu0 0.0
    %1957 = vmatpush1.msra.mxu0 %v1878
    %1958 = vmatprep.subr.mxu0 0.0
    %1959 = vmatpush1.msra.mxu0 %v1877
    %1960 = vmatprep.subr.mxu0 0.0
    %1961 = vmatpush1.msra.mxu0 %v1876
    %1962 = vmatprep.subr.mxu0 0.0
    %1963 = vmatpush1.msra.mxu0 %v1875
    %1964 = vmatprep.subr.mxu0 0.0
    %1965 = vmatpush2.msra.mxu0 0.0
    %1966 = vmatprep.subr.mxu0 0.0
    %1967 = vmatpush2.msra.mxu0 0.0
    %1968 = vmatprep.subr.mxu0 0.0
    %1969 = vmatpush2.msra.mxu0 0.0
    %1970 = vmatprep.subr.mxu0 0.0
    %1971 = vmatpush2.msra.mxu0 0.0
    %1972 = vmatprep.subr.mxu0 0.0
    %1973 = vmatpush2.msra.mxu0 0.0
    %1974 = vmatprep.subr.mxu0 0.0
    %1975 = vmatpush2.msra.mxu0 0.0
    %1976 = vmatprep.subr.mxu0 0.0
    %1977 = vmatpush2.msra.mxu0 0.0
    %1978 = vmatprep.subr.mxu0 0.0
    %1979 = vmatpush2.msra.mxu0 0.0
    %1980 = vmatprep.subr.mxu0 0.0
    %1981 = vmatpush2.msra.mxu0 0.0
    %1982 = vmatprep.subr.mxu0 0.0
    %1983 = vmatpush2.msra.mxu0 0.0
    %1984 = vmatprep.subr.mxu0 0.0
    %1985 = vmatpush2.msra.mxu0 0.0
    %1986 = vmatprep.subr.mxu0 0.0
    %1987 = vmatpush2.msra.mxu0 0.0
    %1988 = vmatprep.subr.mxu0 0.0
    %1989 = vmatpush2.msra.mxu0 0.0
    %1990 = vmatprep.subr.mxu0 0.0
    %1991 = vmatpush2.msra.mxu0 0.0
    %1992 = vmatprep.subr.mxu0 0.0
    %1993 = vmatpush2.msra.mxu0 0.0
    %1994 = vmatprep.subr.mxu0 0.0
    %1995 = vmatpush2.msra.mxu0 0.0
    %1996 = vmatprep.mubr.f32.mxu0 0.0
    %1997 = vmatmul.mubr.f32.gmra.mxu0 %v1885
    %v1998 = vpop.f32.mrf.mxu0
    %v1999 = vadd.f32 0.0, %v1998
    %v2000 = vpop.f32.mrf.mxu0
    %2001 = vmatprep.mubr.f32.mxu0 0.0
    %2002 = vmatmul.mubr.f32.gmra.mxu0 %v1888
    %v2003 = vpop.f32.mrf.mxu0
    %v2004 = vadd.f32 0.0, %v2003
    %v2005 = vpop.f32.mrf.mxu0
    %2006 = vmatprep.mubr.f32.mxu0 0.0
    %2007 = vmatmul.mubr.f32.gmra.mxu0 %v1891
    %v2008 = vpop.f32.mrf.mxu0
    %v2009 = vadd.f32 0.0, %v2008
    %v2010 = vpop.f32.mrf.mxu0
    %2011 = vmatprep.mubr.f32.mxu0 0.0
    %2012 = vmatmul.mubr.f32.gmra.mxu0 %v1894
    %v2013 = vpop.f32.mrf.mxu0
    %v2014 = vadd.f32 0.0, %v2013
    %v2015 = vpop.f32.mrf.mxu0
    %2016 = vmatprep.mubr.f32.mxu0 0.0
    %2017 = vmatmul.mubr.f32.gmra.mxu0 %v1897
    %v2018 = vpop.f32.mrf.mxu0
    %v2019 = vadd.f32 0.0, %v2018
    %v2020 = vpop.f32.mrf.mxu0
    %2021 = vmatprep.mubr.f32.mxu0 0.0
    %2022 = vmatmul.mubr.f32.gmra.mxu0 %v1900
    %v2023 = vpop.f32.mrf.mxu0
    %v2024 = vadd.f32 0.0, %v2023
    %v2025 = vpop.f32.mrf.mxu0
    %2026 = vmatprep.mubr.f32.mxu0 0.0
    %2027 = vmatmul.mubr.f32.gmra.mxu0 %v1903
    %v2028 = vpop.f32.mrf.mxu0
    %v2029 = vadd.f32 0.0, %v2028
    %v2030 = vpop.f32.mrf.mxu0
    %2031 = vmatprep.mubr.f32.mxu0 0.0
    %2032 = vmatmul.mubr.f32.gmra.mxu0 %v1906
    %v2033 = vpop.f32.mrf.mxu0
    %v2034 = vadd.f32 0.0, %v2033
    %v2035 = vpop.f32.mrf.mxu0
    %2036 = vmatprep.mubr.f32.mxu0 0.0
    %2037 = vmatmul.mubr.f32.gmra.mxu0 %v1909
    %v2038 = vpop.f32.mrf.mxu0
    %v2039 = vadd.f32 0.0, %v2038
    %v2040 = vpop.f32.mrf.mxu0
    %2041 = vmatprep.mubr.f32.mxu0 0.0
    %2042 = vmatmul.mubr.f32.gmra.mxu0 %v1912
    %v2043 = vpop.f32.mrf.mxu0
    %v2044 = vadd.f32 0.0, %v2043
    %v2045 = vpop.f32.mrf.mxu0
    %2046 = vmatprep.mubr.f32.mxu0 0.0
    %2047 = vmatmul.mubr.f32.gmra.mxu0 %v1915
    %v2048 = vpop.f32.mrf.mxu0
    %v2049 = vadd.f32 0.0, %v2048
    %v2050 = vpop.f32.mrf.mxu0
    %2051 = vmatprep.mubr.f32.mxu0 0.0
    %2052 = vmatmul.mubr.f32.gmra.mxu0 %v1918
    %v2053 = vpop.f32.mrf.mxu0
    %v2054 = vadd.f32 0.0, %v2053
    %v2055 = vpop.f32.mrf.mxu0
    %2056 = vmatprep.mubr.f32.mxu0 0.0
    %2057 = vmatmul.mubr.f32.gmra.mxu0 %v1921
    %v2058 = vpop.f32.mrf.mxu0
    %v2059 = vadd.f32 0.0, %v2058
    %v2060 = vpop.f32.mrf.mxu0
    %2061 = vmatprep.mubr.f32.mxu0 0.0
    %2062 = vmatmul.mubr.f32.gmra.mxu0 %v1924
    %v2063 = vpop.f32.mrf.mxu0
    %v2064 = vadd.f32 0.0, %v2063
    %v2065 = vpop.f32.mrf.mxu0
    %2066 = vmatprep.mubr.f32.mxu0 0.0
    %2067 = vmatmul.mubr.f32.gmra.mxu0 %v1927
    %v2068 = vpop.f32.mrf.mxu0
    %v2069 = vadd.f32 0.0, %v2068
    %v2070 = vpop.f32.mrf.mxu0
    %2071 = vmatprep.mubr.f32.mxu0 0.0
    %2072 = vmatmul.mubr.f32.gmra.mxu0 %v1930
    %v2073 = vpop.f32.mrf.mxu0
    %v2074 = vadd.f32 0.0, %v2073
    %v2075 = vpop.f32.mrf.mxu0
    %2076 = vdwg.mxu0
    %v2077 = vadd.f32 %v56, %v1999
    %v2078 = vadd.f32 %v57, %v2004
    %v2079 = vadd.f32 %v58, %v2009
    %v2080 = vadd.f32 %v59, %v2014
    %v2081 = vadd.f32 %v60, %v2019
    %v2082 = vadd.f32 %v61, %v2024
    %v2083 = vadd.f32 %v62, %v2029
    %v2084 = vadd.f32 %v63, %v2034
    %v2085 = vadd.f32 %v64, %v2039
    %v2086 = vadd.f32 %v65, %v2044
    %v2087 = vadd.f32 %v66, %v2049
    %v2088 = vadd.f32 %v67, %v2054
    %v2089 = vadd.f32 %v68, %v2059
    %v2090 = vadd.f32 %v69, %v2064
    %v2091 = vadd.f32 %v70, %v2069
    %v2092 = vadd.f32 %v71, %v2074
    %2093 = vst [vmem:[#allocation9] sm:$0xff] %v2077
    %2094 = vst [vmem:[#allocation9 + $0x8] sm:$0xff] %v2078
    %2095 = vst [vmem:[#allocation9 + $0x10] sm:$0xff] %v2079
    %2096 = vst [vmem:[#allocation9 + $0x18] sm:$0xff] %v2080
    %2097 = vst [vmem:[#allocation9 + $0x20] sm:$0xff] %v2081
    %2098 = vst [vmem:[#allocation9 + $0x28] sm:$0xff] %v2082
    %2099 = vst [vmem:[#allocation9 + $0x30] sm:$0xff] %v2083
    %2100 = vst [vmem:[#allocation9 + $0x38] sm:$0xff] %v2084
    %2101 = vst [vmem:[#allocation9 + $0x40] sm:$0xff] %v2085
    %2102 = vst [vmem:[#allocation9 + $0x48] sm:$0xff] %v2086
    %2103 = vst [vmem:[#allocation9 + $0x50] sm:$0xff] %v2087
    %2104 = vst [vmem:[#allocation9 + $0x58] sm:$0xff] %v2088
    %2105 = vst [vmem:[#allocation9 + $0x60] sm:$0xff] %v2089
    %2106 = vst [vmem:[#allocation9 + $0x68] sm:$0xff] %v2090
    %2107 = vst [vmem:[#allocation9 + $0x70] sm:$0xff] %v2091
    %2108 = vst [vmem:[#allocation9 + $0x78] sm:$0xff] %v2092
    // Predicated region
    $region26: #{_lambda_.1} parent=1 // pred_check
      _
    $region27: #{_lambda_.1} parent=1 // pred_check_branch
      %2110 = sbr.rel (0) target = $region29
    $region28: #{_lambda_.1} parent=1 // pred_region
      %s2112 = ssub.s32 2048, 2048
      %2113 = vsyncadd [#allocation5], %s2112
      %s2114 = sshll.u32 [#allocation9], 4
      %s2115 = int_to_ptr.vmem [resolvable:$true] %s2114
      %2120 = dma.vmem_to_hbm [thread:$0]  %s2115, 2048, %s3, [#allocation5], 128, 128, 8
    $region29: #{_lambda_.1} parent=1 // pred_fallthru
      _
    // Predicated region
    $region30: #{_lambda_.1} parent=1 // pred_check
      _
    $region31: #{_lambda_.1} parent=1 // pred_check_branch
      %2122 = sbr.rel (0) target = $region33
    $region32: #{_lambda_.1} parent=1 // pred_region
      %2123 = dma.done [#allocation5], 2048
    $region33: #{_lambda_.1} parent=1 // pred_fallthru
      _
    %2124 = vsyncpa [#allocation4], 1
    %2125 = vsyncpa [#allocation7], 1
    %2126 = vsyncpa [#allocation5], 1

</llo_original>
